<compile_context>
chip_gen: v6e
topology: v6e:2x2x1
jax: 0.10.0
libtpu: 0.0.40
codegen_flags: <defaults>
</compile_context>

<pallas_src>
import functools

import jax
import jax.numpy as jnp
import numpy as np
from jax import lax
from jax.experimental import pallas as pl
from jax.experimental.pallas import tpu as pltpu


def _round_up(x, m):
    return ((x + m - 1) // m) * m


def _prep_gate_cols(a, h, hp):
    """Last dim 4*h in PyTorch LSTM gate order (i, f, g, o) -> padded 4*hp in
    order (i, f, o, g): the three sigmoid gates form one contiguous [0, 3hp)
    slice and tanh(g) is [3hp, 4hp). Padding columns are zero."""
    pad = [(0, 0)] * (a.ndim - 1) + [(0, hp - h)]
    blocks = [jnp.pad(a[..., k * h:(k + 1) * h], pad) for k in range(4)]
    return jnp.concatenate([blocks[0], blocks[1], blocks[3], blocks[2]],
                           axis=-1)


def _tpu_core_info():
    """Best-effort (num_tensorcores, vmem_bytes) with safe fallbacks."""
    num_cores = 1
    vmem_bytes = 64 * 1024 * 1024
    try:
        info = pltpu.get_tpu_info()
        vmem_bytes = int(getattr(info, "vmem_capacity_bytes", vmem_bytes))
        for attr in ("num_cores", "core_count", "tensorcore_count",
                     "num_tensorcores", "cores_per_chip"):
            v = getattr(info, attr, None)
            if v:
                num_cores = int(v)
                break
    except Exception:
        pass
    return num_cores, vmem_bytes


# ----------------------------------------------------------------------------
# Pallas kernel: one (batch-block, time-block) grid step of the LSTM recurrence
# ----------------------------------------------------------------------------
def _lstm_layer_kernel(*refs, hp, t_tile, pad_t, unroll, fused_input,
                       emit_hseq):
    if fused_input:
        hin_ref, wih_ref, whh_ref, bias_ref = refs[:4]
        idx = 4
    else:
        xg_ref, whh_ref = refs[:2]
        idx = 2
    hseq_ref = None
    if emit_hseq:
        hseq_ref = refs[idx]
        idx += 1
    hf_ref, cf_ref = refs[idx], refs[idx + 1]
    scratch = refs[idx + 2:]
    if fused_input:
        h_scr, c_scr, xg_scr = scratch
    else:
        h_scr, c_scr = scratch
        xg_scr = None

    t_blk = pl.program_id(1)
    n_t = pl.num_programs(1)

    @pl.when(t_blk == 0)
    def _init():
        h_scr[...] = jnp.zeros_like(h_scr)
        c_scr[...] = jnp.zeros_like(c_scr)

    w_hh = whh_ref[...]          # hoisted: loaded once per time block

    if fused_input:
        # Whole-block x-gate matmul (off the serial path): the previous
        # layer's hidden block never touches HBM as 4hp-wide gates.
        b_tile = h_scr.shape[0]
        hin = hin_ref[...]                                   # (t, b, hp)
        xg_blk = jnp.dot(hin.reshape(t_tile * b_tile, hp), wih_ref[...],
                         preferred_element_type=jnp.float32) + bias_ref[...]
        xg_scr[...] = xg_blk.reshape(t_tile, b_tile, 4 * hp)
        if pad_t:
            # Front-padded steps must have exactly-zero gates (bias would
            # otherwise leak into the zero initial state).
            @pl.when(t_blk == 0)
            def _zero_front_pad():
                xg_scr[0:pad_t] = jnp.zeros((pad_t, b_tile, 4 * hp),
                                            dtype=xg_scr.dtype)
        xg_src = xg_scr
    else:
        xg_src = xg_ref

    def step(i, carry):
        h, c = carry
        # Only the small h_{t-1} @ W_hh matmul remains on the serial path.
        gates = xg_src[i] + jnp.dot(h, w_hh,
                                    preferred_element_type=jnp.float32)
        # Gate order (i, f, o, g): one wide sigmoid + one tanh per step.
        sig = jax.nn.sigmoid(gates[:, 0:3 * hp])
        g_g = jnp.tanh(gates[:, 3 * hp:4 * hp])
        i_g = sig[:, 0:hp]
        f_g = sig[:, hp:2 * hp]
        o_g = sig[:, 2 * hp:3 * hp]
        c = f_g * c + i_g * g_g
        h = o_g * jnp.tanh(c)
        if emit_hseq:
            hseq_ref[i] = h
        return (h, c)

    # h/c live in vregs across the unrolled steps; scratch written once below.
    h, c = lax.fori_loop(0, t_tile, step, (h_scr[...], c_scr[...]),
                         unroll=unroll)

    h_scr[...] = h
    c_scr[...] = c

    @pl.when(t_blk == n_t - 1)
    def _finalize():
        hf_ref[...] = h
        cf_ref[...] = c


def _lstm_layer_pallas(inputs, *, hp, b_tile, t_tile, pad_t, unroll,
                       fused_input, emit_hseq, core_parallel, vmem_limit):
    if fused_input:
        hin = inputs[0]
        t_pad, b_pad, _ = hin.shape
        in_specs = [
            pl.BlockSpec((t_tile, b_tile, hp), lambda b, t: (t, b, 0)),
            # W_ih / W_hh / bias: constant block index -> VMEM resident.
            pl.BlockSpec((hp, 4 * hp), lambda b, t: (0, 0)),
            pl.BlockSpec((hp, 4 * hp), lambda b, t: (0, 0)),
            pl.BlockSpec((1, 4 * hp), lambda b, t: (0, 0)),
        ]
        scratch = [
            pltpu.VMEM((b_tile, hp), jnp.float32),               # h carry
            pltpu.VMEM((b_tile, hp), jnp.float32),               # c carry
            pltpu.VMEM((t_tile, b_tile, 4 * hp), jnp.float32),   # fused x-gates
        ]
    else:
        xg = inputs[0]
        t_pad, b_pad, _ = xg.shape
        in_specs = [
            pl.BlockSpec((t_tile, b_tile, 4 * hp), lambda b, t: (t, b, 0)),
            pl.BlockSpec((hp, 4 * hp), lambda b, t: (0, 0)),
        ]
        scratch = [
            pltpu.VMEM((b_tile, hp), jnp.float32),
            pltpu.VMEM((b_tile, hp), jnp.float32),
        ]

    out_shape = []
    out_specs = []
    if emit_hseq:
        out_shape.append(jax.ShapeDtypeStruct((t_pad, b_pad, hp), jnp.float32))
        out_specs.append(pl.BlockSpec((t_tile, b_tile, hp),
                                      lambda b, t: (t, b, 0)))
    out_shape += [jax.ShapeDtypeStruct((b_pad, hp), jnp.float32),
                  jax.ShapeDtypeStruct((b_pad, hp), jnp.float32)]
    out_specs += [pl.BlockSpec((b_tile, hp), lambda b, t: (b, 0)),
                  pl.BlockSpec((b_tile, hp), lambda b, t: (b, 0))]

    grid = (b_pad // b_tile, t_pad // t_tile)
    if core_parallel:
        # v7x: shard the batch axis across the 2 TensorCores.
        dims = (pltpu.CORE_PARALLEL, pltpu.ARBITRARY)
    else:
        dims = ("arbitrary", "arbitrary")

    kernel = functools.partial(
        _lstm_layer_kernel, hp=hp, t_tile=t_tile, pad_t=pad_t, unroll=unroll,
        fused_input=fused_input, emit_hseq=emit_hseq)

    outs = pl.pallas_call(
        kernel,
        out_shape=tuple(out_shape),
        grid_spec=pltpu.PrefetchScalarGridSpec(
            num_scalar_prefetch=0,
            grid=grid,
            in_specs=in_specs,
            out_specs=tuple(out_specs),
            scratch_shapes=scratch,
        ),
        compiler_params=pltpu.CompilerParams(
            dimension_semantics=dims,
            vmem_limit_bytes=vmem_limit,
        ),
    )(*inputs)

    if emit_hseq:
        hseq, hf, cf = outs
    else:
        hseq = None
        hf, cf = outs
    return hseq, hf, cf


# ----------------------------------------------------------------------------
# Encoder forward (embedding + concat-free gate precompute + Pallas recurrence)
# ----------------------------------------------------------------------------
def encoder_forward(params, x, cat, y, *, hidden_size, num_layers,
                    t_tile_max=64):
    B, T, input_size = x.shape
    emb_table = params["embedding.weight"]
    E = emb_table.shape[1]
    H = hidden_size

    hp = _round_up(H, 32)          # 4*hp multiple of 128 -> lane-dense gates
    b_pad = _round_up(B, 8)        # f32 sublanes

    num_cores, vmem_bytes = _tpu_core_info()
    # Split the batch only when >=2 TensorCores exist (v7x); on single-TC
    # v5e/v6e a split just runs the serial timestep chain twice.
    core_parallel = (num_cores >= 2 and b_pad >= 16 and (b_pad // 2) % 8 == 0)
    b_tile = b_pad // 2 if core_parallel else b_pad

    t_tile = max(1, min(t_tile_max, T))
    t_pad = _round_up(T, t_tile)
    pad_t = t_pad - T              # front padding: exact no-op steps
    unroll = max(1, min(8, t_tile))

    # VMEM budget: generous on 128 MiB chips (v5e/v6e), conservative on v7x.
    vmem_limit = (96 * 1024 * 1024 if vmem_bytes >= 100 * 1024 * 1024
                  else 48 * 1024 * 1024)

    x = x.astype(jnp.float32)
    y = y.astype(jnp.float32)

    # ---- layer 0: precompute x-gates for ALL timesteps, directly time-major.
    # W_ih columns correspond to concat(x, emb, y) -> split per feature group
    # (the concatenated tensor is never materialized); the embedding matmul is
    # folded into the table so its contribution is a single gather.
    w_ih0_t = params["weight_ih_l0"].T                          # (Din, 4H)
    w_x = _prep_gate_cols(w_ih0_t[:input_size], H, hp)          # (in, 4hp)
    w_e = w_ih0_t[input_size:input_size + E]                    # (E, 4H)
    w_y = _prep_gate_cols(w_ih0_t[input_size + E], H, hp)       # (4hp,)
    bias0 = _prep_gate_cols(
        params["bias_ih_l0"] + params["bias_hh_l0"], H, hp)     # (4hp,)
    emb_gate_tbl = _prep_gate_cols(emb_table @ w_e, H, hp)      # (ncats, 4hp)

    # Pad + transpose the SMALL raw inputs, then emit the big gate tensor
    # directly in (T, Bp, 4hp) layout -- no swapaxes copy of the large
    # intermediate.
    x_t = jnp.swapaxes(jnp.pad(x, ((0, b_pad - B), (0, 0), (0, 0))), 0, 1)
    cat_t = jnp.swapaxes(jnp.pad(cat, ((0, b_pad - B), (0, 0))), 0, 1)
    y_t = jnp.swapaxes(jnp.pad(y, ((0, b_pad - B), (0, 0))), 0, 1)
    xg0 = (jnp.einsum("tbi,ig->tbg", x_t, w_x,
                      preferred_element_type=jnp.float32)
           + emb_gate_tbl[cat_t]
           + y_t[..., None] * w_y
           + bias0)                                             # (T, Bp, 4hp)
    if pad_t:
        xg0 = jnp.pad(xg0, ((pad_t, 0), (0, 0), (0, 0)))

    h_finals, c_finals = [], []
    hseq = None
    for layer in range(num_layers):
        emit_hseq = layer < num_layers - 1   # last layer's hseq is never used
        w_hh_t = params[f"weight_hh_l{layer}"].T                # (H, 4H)
        w_hh_p = _prep_gate_cols(
            jnp.pad(w_hh_t, ((0, hp - H), (0, 0))), H, hp)      # (hp, 4hp)

        if layer == 0:
            inputs = (xg0, w_hh_p)
            fused = False
        else:
            w_ih_t = params[f"weight_ih_l{layer}"].T            # (H, 4H)
            w_ih_p = _prep_gate_cols(
                jnp.pad(w_ih_t, ((0, hp - H), (0, 0))), H, hp)  # (hp, 4hp)
            bias_p = _prep_gate_cols(
                params[f"bias_ih_l{layer}"] + params[f"bias_hh_l{layer}"],
                H, hp)[None, :]                                 # (1, 4hp)
            inputs = (hseq, w_ih_p, w_hh_p, bias_p)
            fused = True

        hseq, hf, cf = _lstm_layer_pallas(
            inputs, hp=hp, b_tile=b_tile, t_tile=t_tile, pad_t=pad_t,
            unroll=unroll, fused_input=fused, emit_hseq=emit_hseq,
            core_parallel=core_parallel, vmem_limit=vmem_limit)

        h_finals.append(hf[:B, :H])
        c_finals.append(cf[:B, :H])

    return jnp.stack(h_finals), jnp.stack(c_finals)


# ----------------------------------------------------------------------------
# Pure-JAX reference (mirrors torch.nn.LSTM semantics) for validation
# ----------------------------------------------------------------------------
def encoder_reference(params, x, cat, y, *, hidden_size, num_layers):
    H = hidden_size
    B = x.shape[0]
    emb = params["embedding.weight"][cat]
    layer_in = jnp.swapaxes(
        jnp.concatenate([x, emb, y[..., None]], axis=-1), 0, 1)  # (T, B, D)
    hs, cs = [], []
    for layer in range(num_layers):
        w_ih = params[f"weight_ih_l{layer}"]
        w_hh = params[f"weight_hh_l{layer}"]
        b = params[f"bias_ih_l{layer}"] + params[f"bias_hh_l{layer}"]

        def cell(carry, x_t, w_ih=w_ih, w_hh=w_hh, b=b):
            h, c = carry
            gates = x_t @ w_ih.T + h @ w_hh.T + b
            i = jax.nn.sigmoid(gates[:, 0 * H:1 * H])
            f = jax.nn.sigmoid(gates[:, 1 * H:2 * H])
            g = jnp.tanh(gates[:, 2 * H:3 * H])
            o = jax.nn.sigmoid(gates[:, 3 * H:4 * H])
            c = f * c + i * g
            h = o * jnp.tanh(c)
            return (h, c), h

        init = (jnp.zeros((B, H), jnp.float32), jnp.zeros((B, H), jnp.float32))
        (h, c), hseq = lax.scan(cell, init, layer_in)
        layer_in = hseq
        hs.append(h)
        cs.append(c)
    return jnp.stack(hs), jnp.stack(cs)


if __name__ == "__main__":
    B, T = 2, 8
    input_size, hidden_size, num_layers = 4, 32, 2
    num_cats, embedding_dim = 10, 3

    key = jax.random.PRNGKey(0)
    keys = iter(jax.random.split(key, 16))

    params = {
        "embedding.weight": 0.3 * jax.random.normal(
            next(keys), (num_cats, embedding_dim), jnp.float32),
    }
    scale = 1.0 / np.sqrt(hidden_size)
    d_in0 = input_size + embedding_dim + 1
    for layer in range(num_layers):
        d_in = d_in0 if layer == 0 else hidden_size
        params[f"weight_ih_l{layer}"] = scale * jax.random.normal(
            next(keys), (4 * hidden_size, d_in), jnp.float32)
        params[f"weight_hh_l{layer}"] = scale * jax.random.normal(
            next(keys), (4 * hidden_size, hidden_size), jnp.float32)
        params[f"bias_ih_l{layer}"] = scale * jax.random.normal(
            next(keys), (4 * hidden_size,), jnp.float32)
        params[f"bias_hh_l{layer}"] = scale * jax.random.normal(
            next(keys), (4 * hidden_size,), jnp.float32)

    x = jax.random.normal(next(keys), (B, T, input_size), jnp.float32)
    y = jax.random.normal(next(keys), (B, T), jnp.float32)
    cat = jax.random.randint(next(keys), (B, T), 0, num_cats)

    run = jax.jit(functools.partial(
        encoder_forward, hidden_size=hidden_size, num_layers=num_layers))
    h, c = run(params, x, cat, y)
    jax.block_until_ready((h, c))

    h_ref, c_ref = encoder_reference(
        params, x, cat, y, hidden_size=hidden_size, num_layers=num_layers)
    np.testing.assert_allclose(np.asarray(h), np.asarray(h_ref),
                               rtol=5e-3, atol=5e-3)
    np.testing.assert_allclose(np.asarray(c), np.asarray(c_ref),
                               rtol=5e-3, atol=5e-3)
    print("KERNEL_OK")
</pallas_src>

<mosaic_0001>
module attributes {stable_mosaic.version = 11 : i64} {
  func.func @_lstm_layer_kernel(%arg0: i32, %arg1: i32, %arg2: memref<8x8x128xf32, #tpu.memory_space<vmem>>, %arg3: memref<32x128xf32, #tpu.memory_space<vmem>>, %arg4: memref<8x8x32xf32, #tpu.memory_space<vmem>>, %arg5: memref<8x32xf32, #tpu.memory_space<vmem>>, %arg6: memref<8x32xf32, #tpu.memory_space<vmem>>, %arg7: memref<8x32xf32, #tpu.memory_space<vmem>>, %arg8: memref<8x32xf32, #tpu.memory_space<vmem>>) attributes {dimension_semantics = [#tpu.dimension_semantics<arbitrary>, #tpu.dimension_semantics<arbitrary>], iteration_bounds = array<i64: 1, 1>, scalar_prefetch = 0 : i64, scratch_operands = 2 : i64, tpu.core_type = #tpu.core_type<tc>, window_params = [{transform_indices = @transform_0, window_bounds = array<i64: 8, 8, 128>}, {pipeline_mode = #tpu.pipeline_mode<synchronous>, transform_indices = @transform_1, window_bounds = array<i64: 32, 128>}, {transform_indices = @transform_2, window_bounds = array<i64: 8, 8, 32>}, {transform_indices = @transform_3, window_bounds = array<i64: 8, 32>}, {transform_indices = @transform_4, window_bounds = array<i64: 8, 32>}]} {
    %c0_i32 = arith.constant 0 : i32
    %0 = arith.cmpi eq, %arg1, %c0_i32 : i32
    %1 = arith.extui %0 : i1 to i32
    %c0_i32_0 = arith.constant 0 : i32
    %2 = arith.cmpi ne, %1, %c0_i32_0 : i32
    scf.if %2 {
      %cst_60 = arith.constant 0.000000e+00 : f32
      %211 = vector.broadcast %cst_60 : f32 to vector<8x32xf32>
      %c0_61 = arith.constant 0 : index
      %c0_62 = arith.constant 0 : index
      %212 = vector.load %arg7[%c0_61, %c0_62] : memref<8x32xf32, #tpu.memory_space<vmem>>, vector<8x32xf32>
      tpu.vector_store %arg7[%c0_61, %c0_62], %211 {strides = array<i32>} : memref<8x32xf32, #tpu.memory_space<vmem>>, vector<8x32xf32>,
      %cst_63 = arith.constant 0.000000e+00 : f32
      %213 = vector.broadcast %cst_63 : f32 to vector<8x32xf32>
      %c0_64 = arith.constant 0 : index
      %c0_65 = arith.constant 0 : index
      %214 = vector.load %arg8[%c0_64, %c0_65] : memref<8x32xf32, #tpu.memory_space<vmem>>, vector<8x32xf32>
      tpu.vector_store %arg8[%c0_64, %c0_65], %213 {strides = array<i32>} : memref<8x32xf32, #tpu.memory_space<vmem>>, vector<8x32xf32>,
    } else {
    }
    %c0 = arith.constant 0 : index
    %c0_1 = arith.constant 0 : index
    %3 = vector.load %arg3[%c0, %c0_1] : memref<32x128xf32, #tpu.memory_space<vmem>>, vector<32x128xf32>
    %c0_2 = arith.constant 0 : index
    %c0_3 = arith.constant 0 : index
    %4 = vector.load %arg7[%c0_2, %c0_3] : memref<8x32xf32, #tpu.memory_space<vmem>>, vector<8x32xf32>
    %c0_4 = arith.constant 0 : index
    %c0_5 = arith.constant 0 : index
    %5 = vector.load %arg8[%c0_4, %c0_5] : memref<8x32xf32, #tpu.memory_space<vmem>>, vector<8x32xf32>
    %c0_i32_6 = arith.constant 0 : i32
    %6 = arith.index_cast %c0_i32_6 : i32 to index
    %c0_7 = arith.constant 0 : index
    %c0_8 = arith.constant 0 : index
    %7 = vector.load %arg2[%6, %c0_7, %c0_8] : memref<8x8x128xf32, #tpu.memory_space<vmem>>, vector<1x8x128xf32>
    %8 = vector.shape_cast %7 : vector<1x8x128xf32> to vector<8x128xf32>
    %cst = arith.constant dense<0.000000e+00> : vector<8x128xf32>
    %9 = tpu.matmul %4, %3, %cst {dimension_numbers = #tpu.dot_dimension_numbers<[1], [0], [0], [1], [0, 0, 1, 1], [], []>} : vector<8x32xf32>, vector<32x128xf32>, vector<8x128xf32> -> vector<8x128xf32>
    %10 = arith.addf %8, %9 : vector<8x128xf32>
    %11 = vector.extract_strided_slice %10 {offsets = [0, 0], sizes = [8, 96], strides = [1, 1]} : vector<8x128xf32> to vector<8x96xf32>
    %12 = arith.negf %11 : vector<8x96xf32>
    %13 = math.exp %12 : vector<8x96xf32>
    %cst_9 = arith.constant 1.000000e+00 : f32
    %14 = vector.broadcast %cst_9 : f32 to vector<8x96xf32>
    %15 = arith.addf %14, %13 : vector<8x96xf32>
    %16 = arith.divf %14, %15 : vector<8x96xf32>
    %17 = vector.extract_strided_slice %10 {offsets = [0, 96], sizes = [8, 32], strides = [1, 1]} : vector<8x128xf32> to vector<8x32xf32>
    %18 = math.tanh %17 : vector<8x32xf32>
    %19 = vector.extract_strided_slice %16 {offsets = [0, 0], sizes = [8, 32], strides = [1, 1]} : vector<8x96xf32> to vector<8x32xf32>
    %20 = vector.extract_strided_slice %16 {offsets = [0, 32], sizes = [8, 32], strides = [1, 1]} : vector<8x96xf32> to vector<8x32xf32>
    %21 = vector.extract_strided_slice %16 {offsets = [0, 64], sizes = [8, 32], strides = [1, 1]} : vector<8x96xf32> to vector<8x32xf32>
    %22 = arith.mulf %20, %5 : vector<8x32xf32>
    %23 = arith.mulf %19, %18 : vector<8x32xf32>
    %24 = arith.addf %22, %23 : vector<8x32xf32>
    %25 = math.tanh %24 : vector<8x32xf32>
    %26 = arith.mulf %21, %25 : vector<8x32xf32>
    %27 = arith.index_cast %c0_i32_6 : i32 to index
    %c0_10 = arith.constant 0 : index
    %c0_11 = arith.constant 0 : index
    %28 = vector.load %arg4[%27, %c0_10, %c0_11] : memref<8x8x32xf32, #tpu.memory_space<vmem>>, vector<1x8x32xf32>
    %29 = vector.shape_cast %28 : vector<1x8x32xf32> to vector<8x32xf32>
    %30 = vector.shape_cast %26 : vector<8x32xf32> to vector<1x8x32xf32>
    tpu.vector_store %arg4[%27, %c0_10, %c0_11], %30 {strides = array<i32>} : memref<8x8x32xf32, #tpu.memory_space<vmem>>, vector<1x8x32xf32>,
    %c1_i32 = arith.constant 1 : i32
    %31 = arith.index_cast %c1_i32 : i32 to index
    %c0_12 = arith.constant 0 : index
    %c0_13 = arith.constant 0 : index
    %32 = vector.load %arg2[%31, %c0_12, %c0_13] : memref<8x8x128xf32, #tpu.memory_space<vmem>>, vector<1x8x128xf32>
    %33 = vector.shape_cast %32 : vector<1x8x128xf32> to vector<8x128xf32>
    %cst_14 = arith.constant dense<0.000000e+00> : vector<8x128xf32>
    %34 = tpu.matmul %26, %3, %cst_14 {dimension_numbers = #tpu.dot_dimension_numbers<[1], [0], [0], [1], [0, 0, 1, 1], [], []>} : vector<8x32xf32>, vector<32x128xf32>, vector<8x128xf32> -> vector<8x128xf32>
    %35 = arith.addf %33, %34 : vector<8x128xf32>
    %36 = vector.extract_strided_slice %35 {offsets = [0, 0], sizes = [8, 96], strides = [1, 1]} : vector<8x128xf32> to vector<8x96xf32>
    %37 = arith.negf %36 : vector<8x96xf32>
    %38 = math.exp %37 : vector<8x96xf32>
    %cst_15 = arith.constant 1.000000e+00 : f32
    %39 = vector.broadcast %cst_15 : f32 to vector<8x96xf32>
    %40 = arith.addf %39, %38 : vector<8x96xf32>
    %41 = arith.divf %39, %40 : vector<8x96xf32>
    %42 = vector.extract_strided_slice %35 {offsets = [0, 96], sizes = [8, 32], strides = [1, 1]} : vector<8x128xf32> to vector<8x32xf32>
    %43 = math.tanh %42 : vector<8x32xf32>
    %44 = vector.extract_strided_slice %41 {offsets = [0, 0], sizes = [8, 32], strides = [1, 1]} : vector<8x96xf32> to vector<8x32xf32>
    %45 = vector.extract_strided_slice %41 {offsets = [0, 32], sizes = [8, 32], strides = [1, 1]} : vector<8x96xf32> to vector<8x32xf32>
    %46 = vector.extract_strided_slice %41 {offsets = [0, 64], sizes = [8, 32], strides = [1, 1]} : vector<8x96xf32> to vector<8x32xf32>
    %47 = arith.mulf %45, %24 : vector<8x32xf32>
    %48 = arith.mulf %44, %43 : vector<8x32xf32>
    %49 = arith.addf %47, %48 : vector<8x32xf32>
    %50 = math.tanh %49 : vector<8x32xf32>
    %51 = arith.mulf %46, %50 : vector<8x32xf32>
    %52 = arith.index_cast %c1_i32 : i32 to index
    %c0_16 = arith.constant 0 : index
    %c0_17 = arith.constant 0 : index
    %53 = vector.load %arg4[%52, %c0_16, %c0_17] : memref<8x8x32xf32, #tpu.memory_space<vmem>>, vector<1x8x32xf32>
    %54 = vector.shape_cast %53 : vector<1x8x32xf32> to vector<8x32xf32>
    %55 = vector.shape_cast %51 : vector<8x32xf32> to vector<1x8x32xf32>
    tpu.vector_store %arg4[%52, %c0_16, %c0_17], %55 {strides = array<i32>} : memref<8x8x32xf32, #tpu.memory_space<vmem>>, vector<1x8x32xf32>,
    %c2_i32 = arith.constant 2 : i32
    %56 = arith.index_cast %c2_i32 : i32 to index
    %c0_18 = arith.constant 0 : index
    %c0_19 = arith.constant 0 : index
    %57 = vector.load %arg2[%56, %c0_18, %c0_19] : memref<8x8x128xf32, #tpu.memory_space<vmem>>, vector<1x8x128xf32>
    %58 = vector.shape_cast %57 : vector<1x8x128xf32> to vector<8x128xf32>
    %cst_20 = arith.constant dense<0.000000e+00> : vector<8x128xf32>
    %59 = tpu.matmul %51, %3, %cst_20 {dimension_numbers = #tpu.dot_dimension_numbers<[1], [0], [0], [1], [0, 0, 1, 1], [], []>} : vector<8x32xf32>, vector<32x128xf32>, vector<8x128xf32> -> vector<8x128xf32>
    %60 = arith.addf %58, %59 : vector<8x128xf32>
    %61 = vector.extract_strided_slice %60 {offsets = [0, 0], sizes = [8, 96], strides = [1, 1]} : vector<8x128xf32> to vector<8x96xf32>
    %62 = arith.negf %61 : vector<8x96xf32>
    %63 = math.exp %62 : vector<8x96xf32>
    %cst_21 = arith.constant 1.000000e+00 : f32
    %64 = vector.broadcast %cst_21 : f32 to vector<8x96xf32>
    %65 = arith.addf %64, %63 : vector<8x96xf32>
    %66 = arith.divf %64, %65 : vector<8x96xf32>
    %67 = vector.extract_strided_slice %60 {offsets = [0, 96], sizes = [8, 32], strides = [1, 1]} : vector<8x128xf32> to vector<8x32xf32>
    %68 = math.tanh %67 : vector<8x32xf32>
    %69 = vector.extract_strided_slice %66 {offsets = [0, 0], sizes = [8, 32], strides = [1, 1]} : vector<8x96xf32> to vector<8x32xf32>
    %70 = vector.extract_strided_slice %66 {offsets = [0, 32], sizes = [8, 32], strides = [1, 1]} : vector<8x96xf32> to vector<8x32xf32>
    %71 = vector.extract_strided_slice %66 {offsets = [0, 64], sizes = [8, 32], strides = [1, 1]} : vector<8x96xf32> to vector<8x32xf32>
    %72 = arith.mulf %70, %49 : vector<8x32xf32>
    %73 = arith.mulf %69, %68 : vector<8x32xf32>
    %74 = arith.addf %72, %73 : vector<8x32xf32>
    %75 = math.tanh %74 : vector<8x32xf32>
    %76 = arith.mulf %71, %75 : vector<8x32xf32>
    %77 = arith.index_cast %c2_i32 : i32 to index
    %c0_22 = arith.constant 0 : index
    %c0_23 = arith.constant 0 : index
    %78 = vector.load %arg4[%77, %c0_22, %c0_23] : memref<8x8x32xf32, #tpu.memory_space<vmem>>, vector<1x8x32xf32>
    %79 = vector.shape_cast %78 : vector<1x8x32xf32> to vector<8x32xf32>
    %80 = vector.shape_cast %76 : vector<8x32xf32> to vector<1x8x32xf32>
    tpu.vector_store %arg4[%77, %c0_22, %c0_23], %80 {strides = array<i32>} : memref<8x8x32xf32, #tpu.memory_space<vmem>>, vector<1x8x32xf32>,
    %c3_i32 = arith.constant 3 : i32
    %81 = arith.index_cast %c3_i32 : i32 to index
    %c0_24 = arith.constant 0 : index
    %c0_25 = arith.constant 0 : index
    %82 = vector.load %arg2[%81, %c0_24, %c0_25] : memref<8x8x128xf32, #tpu.memory_space<vmem>>, vector<1x8x128xf32>
    %83 = vector.shape_cast %82 : vector<1x8x128xf32> to vector<8x128xf32>
    %cst_26 = arith.constant dense<0.000000e+00> : vector<8x128xf32>
    %84 = tpu.matmul %76, %3, %cst_26 {dimension_numbers = #tpu.dot_dimension_numbers<[1], [0], [0], [1], [0, 0, 1, 1], [], []>} : vector<8x32xf32>, vector<32x128xf32>, vector<8x128xf32> -> vector<8x128xf32>
    %85 = arith.addf %83, %84 : vector<8x128xf32>
    %86 = vector.extract_strided_slice %85 {offsets = [0, 0], sizes = [8, 96], strides = [1, 1]} : vector<8x128xf32> to vector<8x96xf32>
    %87 = arith.negf %86 : vector<8x96xf32>
    %88 = math.exp %87 : vector<8x96xf32>
    %cst_27 = arith.constant 1.000000e+00 : f32
    %89 = vector.broadcast %cst_27 : f32 to vector<8x96xf32>
    %90 = arith.addf %89, %88 : vector<8x96xf32>
    %91 = arith.divf %89, %90 : vector<8x96xf32>
    %92 = vector.extract_strided_slice %85 {offsets = [0, 96], sizes = [8, 32], strides = [1, 1]} : vector<8x128xf32> to vector<8x32xf32>
    %93 = math.tanh %92 : vector<8x32xf32>
    %94 = vector.extract_strided_slice %91 {offsets = [0, 0], sizes = [8, 32], strides = [1, 1]} : vector<8x96xf32> to vector<8x32xf32>
    %95 = vector.extract_strided_slice %91 {offsets = [0, 32], sizes = [8, 32], strides = [1, 1]} : vector<8x96xf32> to vector<8x32xf32>
    %96 = vector.extract_strided_slice %91 {offsets = [0, 64], sizes = [8, 32], strides = [1, 1]} : vector<8x96xf32> to vector<8x32xf32>
    %97 = arith.mulf %95, %74 : vector<8x32xf32>
    %98 = arith.mulf %94, %93 : vector<8x32xf32>
    %99 = arith.addf %97, %98 : vector<8x32xf32>
    %100 = math.tanh %99 : vector<8x32xf32>
    %101 = arith.mulf %96, %100 : vector<8x32xf32>
    %102 = arith.index_cast %c3_i32 : i32 to index
    %c0_28 = arith.constant 0 : index
    %c0_29 = arith.constant 0 : index
    %103 = vector.load %arg4[%102, %c0_28, %c0_29] : memref<8x8x32xf32, #tpu.memory_space<vmem>>, vector<1x8x32xf32>
    %104 = vector.shape_cast %103 : vector<1x8x32xf32> to vector<8x32xf32>
    %105 = vector.shape_cast %101 : vector<8x32xf32> to vector<1x8x32xf32>
    tpu.vector_store %arg4[%102, %c0_28, %c0_29], %105 {strides = array<i32>} : memref<8x8x32xf32, #tpu.memory_space<vmem>>, vector<1x8x32xf32>,
    %c4_i32 = arith.constant 4 : i32
    %106 = arith.index_cast %c4_i32 : i32 to index
    %c0_30 = arith.constant 0 : index
    %c0_31 = arith.constant 0 : index
    %107 = vector.load %arg2[%106, %c0_30, %c0_31] : memref<8x8x128xf32, #tpu.memory_space<vmem>>, vector<1x8x128xf32>
    %108 = vector.shape_cast %107 : vector<1x8x128xf32> to vector<8x128xf32>
    %cst_32 = arith.constant dense<0.000000e+00> : vector<8x128xf32>
    %109 = tpu.matmul %101, %3, %cst_32 {dimension_numbers = #tpu.dot_dimension_numbers<[1], [0], [0], [1], [0, 0, 1, 1], [], []>} : vector<8x32xf32>, vector<32x128xf32>, vector<8x128xf32> -> vector<8x128xf32>
    %110 = arith.addf %108, %109 : vector<8x128xf32>
    %111 = vector.extract_strided_slice %110 {offsets = [0, 0], sizes = [8, 96], strides = [1, 1]} : vector<8x128xf32> to vector<8x96xf32>
    %112 = arith.negf %111 : vector<8x96xf32>
    %113 = math.exp %112 : vector<8x96xf32>
    %cst_33 = arith.constant 1.000000e+00 : f32
    %114 = vector.broadcast %cst_33 : f32 to vector<8x96xf32>
    %115 = arith.addf %114, %113 : vector<8x96xf32>
    %116 = arith.divf %114, %115 : vector<8x96xf32>
    %117 = vector.extract_strided_slice %110 {offsets = [0, 96], sizes = [8, 32], strides = [1, 1]} : vector<8x128xf32> to vector<8x32xf32>
    %118 = math.tanh %117 : vector<8x32xf32>
    %119 = vector.extract_strided_slice %116 {offsets = [0, 0], sizes = [8, 32], strides = [1, 1]} : vector<8x96xf32> to vector<8x32xf32>
    %120 = vector.extract_strided_slice %116 {offsets = [0, 32], sizes = [8, 32], strides = [1, 1]} : vector<8x96xf32> to vector<8x32xf32>
    %121 = vector.extract_strided_slice %116 {offsets = [0, 64], sizes = [8, 32], strides = [1, 1]} : vector<8x96xf32> to vector<8x32xf32>
    %122 = arith.mulf %120, %99 : vector<8x32xf32>
    %123 = arith.mulf %119, %118 : vector<8x32xf32>
    %124 = arith.addf %122, %123 : vector<8x32xf32>
    %125 = math.tanh %124 : vector<8x32xf32>
    %126 = arith.mulf %121, %125 : vector<8x32xf32>
    %127 = arith.index_cast %c4_i32 : i32 to index
    %c0_34 = arith.constant 0 : index
    %c0_35 = arith.constant 0 : index
    %128 = vector.load %arg4[%127, %c0_34, %c0_35] : memref<8x8x32xf32, #tpu.memory_space<vmem>>, vector<1x8x32xf32>
    %129 = vector.shape_cast %128 : vector<1x8x32xf32> to vector<8x32xf32>
    %130 = vector.shape_cast %126 : vector<8x32xf32> to vector<1x8x32xf32>
    tpu.vector_store %arg4[%127, %c0_34, %c0_35], %130 {strides = array<i32>} : memref<8x8x32xf32, #tpu.memory_space<vmem>>, vector<1x8x32xf32>,
    %c5_i32 = arith.constant 5 : i32
    %131 = arith.index_cast %c5_i32 : i32 to index
    %c0_36 = arith.constant 0 : index
    %c0_37 = arith.constant 0 : index
    %132 = vector.load %arg2[%131, %c0_36, %c0_37] : memref<8x8x128xf32, #tpu.memory_space<vmem>>, vector<1x8x128xf32>
    %133 = vector.shape_cast %132 : vector<1x8x128xf32> to vector<8x128xf32>
    %cst_38 = arith.constant dense<0.000000e+00> : vector<8x128xf32>
    %134 = tpu.matmul %126, %3, %cst_38 {dimension_numbers = #tpu.dot_dimension_numbers<[1], [0], [0], [1], [0, 0, 1, 1], [], []>} : vector<8x32xf32>, vector<32x128xf32>, vector<8x128xf32> -> vector<8x128xf32>
    %135 = arith.addf %133, %134 : vector<8x128xf32>
    %136 = vector.extract_strided_slice %135 {offsets = [0, 0], sizes = [8, 96], strides = [1, 1]} : vector<8x128xf32> to vector<8x96xf32>
    %137 = arith.negf %136 : vector<8x96xf32>
    %138 = math.exp %137 : vector<8x96xf32>
    %cst_39 = arith.constant 1.000000e+00 : f32
    %139 = vector.broadcast %cst_39 : f32 to vector<8x96xf32>
    %140 = arith.addf %139, %138 : vector<8x96xf32>
    %141 = arith.divf %139, %140 : vector<8x96xf32>
    %142 = vector.extract_strided_slice %135 {offsets = [0, 96], sizes = [8, 32], strides = [1, 1]} : vector<8x128xf32> to vector<8x32xf32>
    %143 = math.tanh %142 : vector<8x32xf32>
    %144 = vector.extract_strided_slice %141 {offsets = [0, 0], sizes = [8, 32], strides = [1, 1]} : vector<8x96xf32> to vector<8x32xf32>
    %145 = vector.extract_strided_slice %141 {offsets = [0, 32], sizes = [8, 32], strides = [1, 1]} : vector<8x96xf32> to vector<8x32xf32>
    %146 = vector.extract_strided_slice %141 {offsets = [0, 64], sizes = [8, 32], strides = [1, 1]} : vector<8x96xf32> to vector<8x32xf32>
    %147 = arith.mulf %145, %124 : vector<8x32xf32>
    %148 = arith.mulf %144, %143 : vector<8x32xf32>
    %149 = arith.addf %147, %148 : vector<8x32xf32>
    %150 = math.tanh %149 : vector<8x32xf32>
    %151 = arith.mulf %146, %150 : vector<8x32xf32>
    %152 = arith.index_cast %c5_i32 : i32 to index
    %c0_40 = arith.constant 0 : index
    %c0_41 = arith.constant 0 : index
    %153 = vector.load %arg4[%152, %c0_40, %c0_41] : memref<8x8x32xf32, #tpu.memory_space<vmem>>, vector<1x8x32xf32>
    %154 = vector.shape_cast %153 : vector<1x8x32xf32> to vector<8x32xf32>
    %155 = vector.shape_cast %151 : vector<8x32xf32> to vector<1x8x32xf32>
    tpu.vector_store %arg4[%152, %c0_40, %c0_41], %155 {strides = array<i32>} : memref<8x8x32xf32, #tpu.memory_space<vmem>>, vector<1x8x32xf32>,
    %c6_i32 = arith.constant 6 : i32
    %156 = arith.index_cast %c6_i32 : i32 to index
    %c0_42 = arith.constant 0 : index
    %c0_43 = arith.constant 0 : index
    %157 = vector.load %arg2[%156, %c0_42, %c0_43] : memref<8x8x128xf32, #tpu.memory_space<vmem>>, vector<1x8x128xf32>
    %158 = vector.shape_cast %157 : vector<1x8x128xf32> to vector<8x128xf32>
    %cst_44 = arith.constant dense<0.000000e+00> : vector<8x128xf32>
    %159 = tpu.matmul %151, %3, %cst_44 {dimension_numbers = #tpu.dot_dimension_numbers<[1], [0], [0], [1], [0, 0, 1, 1], [], []>} : vector<8x32xf32>, vector<32x128xf32>, vector<8x128xf32> -> vector<8x128xf32>
    %160 = arith.addf %158, %159 : vector<8x128xf32>
    %161 = vector.extract_strided_slice %160 {offsets = [0, 0], sizes = [8, 96], strides = [1, 1]} : vector<8x128xf32> to vector<8x96xf32>
    %162 = arith.negf %161 : vector<8x96xf32>
    %163 = math.exp %162 : vector<8x96xf32>
    %cst_45 = arith.constant 1.000000e+00 : f32
    %164 = vector.broadcast %cst_45 : f32 to vector<8x96xf32>
    %165 = arith.addf %164, %163 : vector<8x96xf32>
    %166 = arith.divf %164, %165 : vector<8x96xf32>
    %167 = vector.extract_strided_slice %160 {offsets = [0, 96], sizes = [8, 32], strides = [1, 1]} : vector<8x128xf32> to vector<8x32xf32>
    %168 = math.tanh %167 : vector<8x32xf32>
    %169 = vector.extract_strided_slice %166 {offsets = [0, 0], sizes = [8, 32], strides = [1, 1]} : vector<8x96xf32> to vector<8x32xf32>
    %170 = vector.extract_strided_slice %166 {offsets = [0, 32], sizes = [8, 32], strides = [1, 1]} : vector<8x96xf32> to vector<8x32xf32>
    %171 = vector.extract_strided_slice %166 {offsets = [0, 64], sizes = [8, 32], strides = [1, 1]} : vector<8x96xf32> to vector<8x32xf32>
    %172 = arith.mulf %170, %149 : vector<8x32xf32>
    %173 = arith.mulf %169, %168 : vector<8x32xf32>
    %174 = arith.addf %172, %173 : vector<8x32xf32>
    %175 = math.tanh %174 : vector<8x32xf32>
    %176 = arith.mulf %171, %175 : vector<8x32xf32>
    %177 = arith.index_cast %c6_i32 : i32 to index
    %c0_46 = arith.constant 0 : index
    %c0_47 = arith.constant 0 : index
    %178 = vector.load %arg4[%177, %c0_46, %c0_47] : memref<8x8x32xf32, #tpu.memory_space<vmem>>, vector<1x8x32xf32>
    %179 = vector.shape_cast %178 : vector<1x8x32xf32> to vector<8x32xf32>
    %180 = vector.shape_cast %176 : vector<8x32xf32> to vector<1x8x32xf32>
    tpu.vector_store %arg4[%177, %c0_46, %c0_47], %180 {strides = array<i32>} : memref<8x8x32xf32, #tpu.memory_space<vmem>>, vector<1x8x32xf32>,
    %c7_i32 = arith.constant 7 : i32
    %181 = arith.index_cast %c7_i32 : i32 to index
    %c0_48 = arith.constant 0 : index
    %c0_49 = arith.constant 0 : index
    %182 = vector.load %arg2[%181, %c0_48, %c0_49] : memref<8x8x128xf32, #tpu.memory_space<vmem>>, vector<1x8x128xf32>
    %183 = vector.shape_cast %182 : vector<1x8x128xf32> to vector<8x128xf32>
    %cst_50 = arith.constant dense<0.000000e+00> : vector<8x128xf32>
    %184 = tpu.matmul %176, %3, %cst_50 {dimension_numbers = #tpu.dot_dimension_numbers<[1], [0], [0], [1], [0, 0, 1, 1], [], []>} : vector<8x32xf32>, vector<32x128xf32>, vector<8x128xf32> -> vector<8x128xf32>
    %185 = arith.addf %183, %184 : vector<8x128xf32>
    %186 = vector.extract_strided_slice %185 {offsets = [0, 0], sizes = [8, 96], strides = [1, 1]} : vector<8x128xf32> to vector<8x96xf32>
    %187 = arith.negf %186 : vector<8x96xf32>
    %188 = math.exp %187 : vector<8x96xf32>
    %cst_51 = arith.constant 1.000000e+00 : f32
    %189 = vector.broadcast %cst_51 : f32 to vector<8x96xf32>
    %190 = arith.addf %189, %188 : vector<8x96xf32>
    %191 = arith.divf %189, %190 : vector<8x96xf32>
    %192 = vector.extract_strided_slice %185 {offsets = [0, 96], sizes = [8, 32], strides = [1, 1]} : vector<8x128xf32> to vector<8x32xf32>
    %193 = math.tanh %192 : vector<8x32xf32>
    %194 = vector.extract_strided_slice %191 {offsets = [0, 0], sizes = [8, 32], strides = [1, 1]} : vector<8x96xf32> to vector<8x32xf32>
    %195 = vector.extract_strided_slice %191 {offsets = [0, 32], sizes = [8, 32], strides = [1, 1]} : vector<8x96xf32> to vector<8x32xf32>
    %196 = vector.extract_strided_slice %191 {offsets = [0, 64], sizes = [8, 32], strides = [1, 1]} : vector<8x96xf32> to vector<8x32xf32>
    %197 = arith.mulf %195, %174 : vector<8x32xf32>
    %198 = arith.mulf %194, %193 : vector<8x32xf32>
    %199 = arith.addf %197, %198 : vector<8x32xf32>
    %200 = math.tanh %199 : vector<8x32xf32>
    %201 = arith.mulf %196, %200 : vector<8x32xf32>
    %202 = arith.index_cast %c7_i32 : i32 to index
    %c0_52 = arith.constant 0 : index
    %c0_53 = arith.constant 0 : index
    %203 = vector.load %arg4[%202, %c0_52, %c0_53] : memref<8x8x32xf32, #tpu.memory_space<vmem>>, vector<1x8x32xf32>
    %204 = vector.shape_cast %203 : vector<1x8x32xf32> to vector<8x32xf32>
    %205 = vector.shape_cast %201 : vector<8x32xf32> to vector<1x8x32xf32>
    tpu.vector_store %arg4[%202, %c0_52, %c0_53], %205 {strides = array<i32>} : memref<8x8x32xf32, #tpu.memory_space<vmem>>, vector<1x8x32xf32>,
    %c8_i32 = arith.constant 8 : i32
    %c0_54 = arith.constant 0 : index
    %c0_55 = arith.constant 0 : index
    %206 = vector.load %arg7[%c0_54, %c0_55] : memref<8x32xf32, #tpu.memory_space<vmem>>, vector<8x32xf32>
    tpu.vector_store %arg7[%c0_54, %c0_55], %201 {strides = array<i32>} : memref<8x32xf32, #tpu.memory_space<vmem>>, vector<8x32xf32>,
    %c0_56 = arith.constant 0 : index
    %c0_57 = arith.constant 0 : index
    %207 = vector.load %arg8[%c0_56, %c0_57] : memref<8x32xf32, #tpu.memory_space<vmem>>, vector<8x32xf32>
    tpu.vector_store %arg8[%c0_56, %c0_57], %199 {strides = array<i32>} : memref<8x32xf32, #tpu.memory_space<vmem>>, vector<8x32xf32>,
    %c0_i32_58 = arith.constant 0 : i32
    %208 = arith.cmpi eq, %arg1, %c0_i32_58 : i32
    %209 = arith.extui %208 : i1 to i32
    %c0_i32_59 = arith.constant 0 : i32
    %210 = arith.cmpi ne, %209, %c0_i32_59 : i32
    scf.if %210 {
      %c0_60 = arith.constant 0 : index
      %c0_61 = arith.constant 0 : index
      %211 = vector.load %arg5[%c0_60, %c0_61] : memref<8x32xf32, #tpu.memory_space<vmem>>, vector<8x32xf32>
      tpu.vector_store %arg5[%c0_60, %c0_61], %201 {strides = array<i32>} : memref<8x32xf32, #tpu.memory_space<vmem>>, vector<8x32xf32>,
      %c0_62 = arith.constant 0 : index
      %c0_63 = arith.constant 0 : index
      %212 = vector.load %arg6[%c0_62, %c0_63] : memref<8x32xf32, #tpu.memory_space<vmem>>, vector<8x32xf32>
      tpu.vector_store %arg6[%c0_62, %c0_63], %199 {strides = array<i32>} : memref<8x32xf32, #tpu.memory_space<vmem>>, vector<8x32xf32>,
    } else {
    }
    return
  }
  func.func @transform_0(%arg0: i32, %arg1: i32) -> (i32, i32, i32) {
    %c0_i32 = arith.constant 0 : i32
    %c0_i32_0 = arith.constant 0 : i32
    return %arg1, %arg0, %c0_i32 : i32, i32, i32
  }
  func.func @transform_1(%arg0: i32, %arg1: i32) -> (i32, i32) {
    %c0_i32 = arith.constant 0 : i32
    %c0_i32_0 = arith.constant 0 : i32
    %c0_i32_1 = arith.constant 0 : i32
    return %c0_i32, %c0_i32_0 : i32, i32
  }
  func.func @transform_2(%arg0: i32, %arg1: i32) -> (i32, i32, i32) {
    %c0_i32 = arith.constant 0 : i32
    %c0_i32_0 = arith.constant 0 : i32
    return %arg1, %arg0, %c0_i32 : i32, i32, i32
  }
  func.func @transform_3(%arg0: i32, %arg1: i32) -> (i32, i32) {
    %c0_i32 = arith.constant 0 : i32
    %c0_i32_0 = arith.constant 0 : i32
    return %arg0, %c0_i32 : i32, i32
  }
  func.func @transform_4(%arg0: i32, %arg1: i32) -> (i32, i32) {
    %c0_i32 = arith.constant 0 : i32
    %c0_i32_0 = arith.constant 0 : i32
    return %arg0, %c0_i32 : i32, i32
  }
}

module attributes {stable_mosaic.version = 11 : i64} {
  func.func @_lstm_layer_kernel(%arg0: i32, %arg1: i32, %arg2: memref<8x8x32xf32, #tpu.memory_space<vmem>>, %arg3: memref<32x128xf32, #tpu.memory_space<vmem>>, %arg4: memref<32x128xf32, #tpu.memory_space<vmem>>, %arg5: memref<1x128xf32, #tpu.memory_space<vmem>>, %arg6: memref<8x32xf32, #tpu.memory_space<vmem>>, %arg7: memref<8x32xf32, #tpu.memory_space<vmem>>, %arg8: memref<8x32xf32, #tpu.memory_space<vmem>>, %arg9: memref<8x32xf32, #tpu.memory_space<vmem>>, %arg10: memref<8x8x128xf32, #tpu.memory_space<vmem>>) attributes {dimension_semantics = [#tpu.dimension_semantics<arbitrary>, #tpu.dimension_semantics<arbitrary>], iteration_bounds = array<i64: 1, 1>, scalar_prefetch = 0 : i64, scratch_operands = 3 : i64, tpu.core_type = #tpu.core_type<tc>, window_params = [{transform_indices = @transform_0, window_bounds = array<i64: 8, 8, 32>}, {pipeline_mode = #tpu.pipeline_mode<synchronous>, transform_indices = @transform_1, window_bounds = array<i64: 32, 128>}, {pipeline_mode = #tpu.pipeline_mode<synchronous>, transform_indices = @transform_2, window_bounds = array<i64: 32, 128>}, {pipeline_mode = #tpu.pipeline_mode<synchronous>, transform_indices = @transform_3, window_bounds = array<i64: 1, 128>}, {transform_indices = @transform_4, window_bounds = array<i64: 8, 32>}, {transform_indices = @transform_5, window_bounds = array<i64: 8, 32>}]} {
    %c0_i32 = arith.constant 0 : i32
    %0 = arith.cmpi eq, %arg1, %c0_i32 : i32
    %1 = arith.extui %0 : i1 to i32
    %c0_i32_0 = arith.constant 0 : i32
    %2 = arith.cmpi ne, %1, %c0_i32_0 : i32
    scf.if %2 {
      %cst_55 = arith.constant 0.000000e+00 : f32
      %188 = vector.broadcast %cst_55 : f32 to vector<8x32xf32>
      %c0_56 = arith.constant 0 : index
      %c0_57 = arith.constant 0 : index
      %189 = vector.load %arg8[%c0_56, %c0_57] : memref<8x32xf32, #tpu.memory_space<vmem>>, vector<8x32xf32>
      tpu.vector_store %arg8[%c0_56, %c0_57], %188 {strides = array<i32>} : memref<8x32xf32, #tpu.memory_space<vmem>>, vector<8x32xf32>,
      %cst_58 = arith.constant 0.000000e+00 : f32
      %190 = vector.broadcast %cst_58 : f32 to vector<8x32xf32>
      %c0_59 = arith.constant 0 : index
      %c0_60 = arith.constant 0 : index
      %191 = vector.load %arg9[%c0_59, %c0_60] : memref<8x32xf32, #tpu.memory_space<vmem>>, vector<8x32xf32>
      tpu.vector_store %arg9[%c0_59, %c0_60], %190 {strides = array<i32>} : memref<8x32xf32, #tpu.memory_space<vmem>>, vector<8x32xf32>,
    } else {
    }
    %c0 = arith.constant 0 : index
    %c0_1 = arith.constant 0 : index
    %3 = vector.load %arg4[%c0, %c0_1] : memref<32x128xf32, #tpu.memory_space<vmem>>, vector<32x128xf32>
    %c0_2 = arith.constant 0 : index
    %c0_3 = arith.constant 0 : index
    %c0_4 = arith.constant 0 : index
    %4 = vector.load %arg2[%c0_2, %c0_3, %c0_4] : memref<8x8x32xf32, #tpu.memory_space<vmem>>, vector<8x8x32xf32>
    %5 = vector.shape_cast %4 : vector<8x8x32xf32> to vector<64x32xf32>
    %c0_5 = arith.constant 0 : index
    %c0_6 = arith.constant 0 : index
    %6 = vector.load %arg3[%c0_5, %c0_6] : memref<32x128xf32, #tpu.memory_space<vmem>>, vector<32x128xf32>
    %cst = arith.constant dense<0.000000e+00> : vector<64x128xf32>
    %7 = tpu.matmul %5, %6, %cst {dimension_numbers = #tpu.dot_dimension_numbers<[1], [0], [0], [1], [0, 0, 1, 1], [], []>} : vector<64x32xf32>, vector<32x128xf32>, vector<64x128xf32> -> vector<64x128xf32>
    %c0_7 = arith.constant 0 : index
    %c0_8 = arith.constant 0 : index
    %8 = vector.load %arg5[%c0_7, %c0_8] : memref<1x128xf32, #tpu.memory_space<vmem>>, vector<1x128xf32>
    %9 = vector.broadcast %8 : vector<1x128xf32> to vector<64x128xf32>
    %10 = arith.addf %7, %9 : vector<64x128xf32>
    %11 = vector.shape_cast %10 : vector<64x128xf32> to vector<8x8x128xf32>
    %c0_9 = arith.constant 0 : index
    %c0_10 = arith.constant 0 : index
    %c0_11 = arith.constant 0 : index
    %12 = vector.load %arg10[%c0_9, %c0_10, %c0_11] : memref<8x8x128xf32, #tpu.memory_space<vmem>>, vector<8x8x128xf32>
    tpu.vector_store %arg10[%c0_9, %c0_10, %c0_11], %11 {strides = array<i32>} : memref<8x8x128xf32, #tpu.memory_space<vmem>>, vector<8x8x128xf32>,
    %c0_12 = arith.constant 0 : index
    %c0_13 = arith.constant 0 : index
    %13 = vector.load %arg8[%c0_12, %c0_13] : memref<8x32xf32, #tpu.memory_space<vmem>>, vector<8x32xf32>
    %c0_14 = arith.constant 0 : index
    %c0_15 = arith.constant 0 : index
    %14 = vector.load %arg9[%c0_14, %c0_15] : memref<8x32xf32, #tpu.memory_space<vmem>>, vector<8x32xf32>
    %c0_i32_16 = arith.constant 0 : i32
    %15 = arith.index_cast %c0_i32_16 : i32 to index
    %c0_17 = arith.constant 0 : index
    %c0_18 = arith.constant 0 : index
    %16 = vector.load %arg10[%15, %c0_17, %c0_18] : memref<8x8x128xf32, #tpu.memory_space<vmem>>, vector<1x8x128xf32>
    %17 = vector.shape_cast %16 : vector<1x8x128xf32> to vector<8x128xf32>
    %cst_19 = arith.constant dense<0.000000e+00> : vector<8x128xf32>
    %18 = tpu.matmul %13, %3, %cst_19 {dimension_numbers = #tpu.dot_dimension_numbers<[1], [0], [0], [1], [0, 0, 1, 1], [], []>} : vector<8x32xf32>, vector<32x128xf32>, vector<8x128xf32> -> vector<8x128xf32>
    %19 = arith.addf %17, %18 : vector<8x128xf32>
    %20 = vector.extract_strided_slice %19 {offsets = [0, 0], sizes = [8, 96], strides = [1, 1]} : vector<8x128xf32> to vector<8x96xf32>
    %21 = arith.negf %20 : vector<8x96xf32>
    %22 = math.exp %21 : vector<8x96xf32>
    %cst_20 = arith.constant 1.000000e+00 : f32
    %23 = vector.broadcast %cst_20 : f32 to vector<8x96xf32>
    %24 = arith.addf %23, %22 : vector<8x96xf32>
    %25 = arith.divf %23, %24 : vector<8x96xf32>
    %26 = vector.extract_strided_slice %19 {offsets = [0, 96], sizes = [8, 32], strides = [1, 1]} : vector<8x128xf32> to vector<8x32xf32>
    %27 = math.tanh %26 : vector<8x32xf32>
    %28 = vector.extract_strided_slice %25 {offsets = [0, 0], sizes = [8, 32], strides = [1, 1]} : vector<8x96xf32> to vector<8x32xf32>
    %29 = vector.extract_strided_slice %25 {offsets = [0, 32], sizes = [8, 32], strides = [1, 1]} : vector<8x96xf32> to vector<8x32xf32>
    %30 = vector.extract_strided_slice %25 {offsets = [0, 64], sizes = [8, 32], strides = [1, 1]} : vector<8x96xf32> to vector<8x32xf32>
    %31 = arith.mulf %29, %14 : vector<8x32xf32>
    %32 = arith.mulf %28, %27 : vector<8x32xf32>
    %33 = arith.addf %31, %32 : vector<8x32xf32>
    %34 = math.tanh %33 : vector<8x32xf32>
    %35 = arith.mulf %30, %34 : vector<8x32xf32>
    %c1_i32 = arith.constant 1 : i32
    %36 = arith.index_cast %c1_i32 : i32 to index
    %c0_21 = arith.constant 0 : index
    %c0_22 = arith.constant 0 : index
    %37 = vector.load %arg10[%36, %c0_21, %c0_22] : memref<8x8x128xf32, #tpu.memory_space<vmem>>, vector<1x8x128xf32>
    %38 = vector.shape_cast %37 : vector<1x8x128xf32> to vector<8x128xf32>
    %cst_23 = arith.constant dense<0.000000e+00> : vector<8x128xf32>
    %39 = tpu.matmul %35, %3, %cst_23 {dimension_numbers = #tpu.dot_dimension_numbers<[1], [0], [0], [1], [0, 0, 1, 1], [], []>} : vector<8x32xf32>, vector<32x128xf32>, vector<8x128xf32> -> vector<8x128xf32>
    %40 = arith.addf %38, %39 : vector<8x128xf32>
    %41 = vector.extract_strided_slice %40 {offsets = [0, 0], sizes = [8, 96], strides = [1, 1]} : vector<8x128xf32> to vector<8x96xf32>
    %42 = arith.negf %41 : vector<8x96xf32>
    %43 = math.exp %42 : vector<8x96xf32>
    %cst_24 = arith.constant 1.000000e+00 : f32
    %44 = vector.broadcast %cst_24 : f32 to vector<8x96xf32>
    %45 = arith.addf %44, %43 : vector<8x96xf32>
    %46 = arith.divf %44, %45 : vector<8x96xf32>
    %47 = vector.extract_strided_slice %40 {offsets = [0, 96], sizes = [8, 32], strides = [1, 1]} : vector<8x128xf32> to vector<8x32xf32>
    %48 = math.tanh %47 : vector<8x32xf32>
    %49 = vector.extract_strided_slice %46 {offsets = [0, 0], sizes = [8, 32], strides = [1, 1]} : vector<8x96xf32> to vector<8x32xf32>
    %50 = vector.extract_strided_slice %46 {offsets = [0, 32], sizes = [8, 32], strides = [1, 1]} : vector<8x96xf32> to vector<8x32xf32>
    %51 = vector.extract_strided_slice %46 {offsets = [0, 64], sizes = [8, 32], strides = [1, 1]} : vector<8x96xf32> to vector<8x32xf32>
    %52 = arith.mulf %50, %33 : vector<8x32xf32>
    %53 = arith.mulf %49, %48 : vector<8x32xf32>
    %54 = arith.addf %52, %53 : vector<8x32xf32>
    %55 = math.tanh %54 : vector<8x32xf32>
    %56 = arith.mulf %51, %55 : vector<8x32xf32>
    %c2_i32 = arith.constant 2 : i32
    %57 = arith.index_cast %c2_i32 : i32 to index
    %c0_25 = arith.constant 0 : index
    %c0_26 = arith.constant 0 : index
    %58 = vector.load %arg10[%57, %c0_25, %c0_26] : memref<8x8x128xf32, #tpu.memory_space<vmem>>, vector<1x8x128xf32>
    %59 = vector.shape_cast %58 : vector<1x8x128xf32> to vector<8x128xf32>
    %cst_27 = arith.constant dense<0.000000e+00> : vector<8x128xf32>
    %60 = tpu.matmul %56, %3, %cst_27 {dimension_numbers = #tpu.dot_dimension_numbers<[1], [0], [0], [1], [0, 0, 1, 1], [], []>} : vector<8x32xf32>, vector<32x128xf32>, vector<8x128xf32> -> vector<8x128xf32>
    %61 = arith.addf %59, %60 : vector<8x128xf32>
    %62 = vector.extract_strided_slice %61 {offsets = [0, 0], sizes = [8, 96], strides = [1, 1]} : vector<8x128xf32> to vector<8x96xf32>
    %63 = arith.negf %62 : vector<8x96xf32>
    %64 = math.exp %63 : vector<8x96xf32>
    %cst_28 = arith.constant 1.000000e+00 : f32
    %65 = vector.broadcast %cst_28 : f32 to vector<8x96xf32>
    %66 = arith.addf %65, %64 : vector<8x96xf32>
    %67 = arith.divf %65, %66 : vector<8x96xf32>
    %68 = vector.extract_strided_slice %61 {offsets = [0, 96], sizes = [8, 32], strides = [1, 1]} : vector<8x128xf32> to vector<8x32xf32>
    %69 = math.tanh %68 : vector<8x32xf32>
    %70 = vector.extract_strided_slice %67 {offsets = [0, 0], sizes = [8, 32], strides = [1, 1]} : vector<8x96xf32> to vector<8x32xf32>
    %71 = vector.extract_strided_slice %67 {offsets = [0, 32], sizes = [8, 32], strides = [1, 1]} : vector<8x96xf32> to vector<8x32xf32>
    %72 = vector.extract_strided_slice %67 {offsets = [0, 64], sizes = [8, 32], strides = [1, 1]} : vector<8x96xf32> to vector<8x32xf32>
    %73 = arith.mulf %71, %54 : vector<8x32xf32>
    %74 = arith.mulf %70, %69 : vector<8x32xf32>
    %75 = arith.addf %73, %74 : vector<8x32xf32>
    %76 = math.tanh %75 : vector<8x32xf32>
    %77 = arith.mulf %72, %76 : vector<8x32xf32>
    %c3_i32 = arith.constant 3 : i32
    %78 = arith.index_cast %c3_i32 : i32 to index
    %c0_29 = arith.constant 0 : index
    %c0_30 = arith.constant 0 : index
    %79 = vector.load %arg10[%78, %c0_29, %c0_30] : memref<8x8x128xf32, #tpu.memory_space<vmem>>, vector<1x8x128xf32>
    %80 = vector.shape_cast %79 : vector<1x8x128xf32> to vector<8x128xf32>
    %cst_31 = arith.constant dense<0.000000e+00> : vector<8x128xf32>
    %81 = tpu.matmul %77, %3, %cst_31 {dimension_numbers = #tpu.dot_dimension_numbers<[1], [0], [0], [1], [0, 0, 1, 1], [], []>} : vector<8x32xf32>, vector<32x128xf32>, vector<8x128xf32> -> vector<8x128xf32>
    %82 = arith.addf %80, %81 : vector<8x128xf32>
    %83 = vector.extract_strided_slice %82 {offsets = [0, 0], sizes = [8, 96], strides = [1, 1]} : vector<8x128xf32> to vector<8x96xf32>
    %84 = arith.negf %83 : vector<8x96xf32>
    %85 = math.exp %84 : vector<8x96xf32>
    %cst_32 = arith.constant 1.000000e+00 : f32
    %86 = vector.broadcast %cst_32 : f32 to vector<8x96xf32>
    %87 = arith.addf %86, %85 : vector<8x96xf32>
    %88 = arith.divf %86, %87 : vector<8x96xf32>
    %89 = vector.extract_strided_slice %82 {offsets = [0, 96], sizes = [8, 32], strides = [1, 1]} : vector<8x128xf32> to vector<8x32xf32>
    %90 = math.tanh %89 : vector<8x32xf32>
    %91 = vector.extract_strided_slice %88 {offsets = [0, 0], sizes = [8, 32], strides = [1, 1]} : vector<8x96xf32> to vector<8x32xf32>
    %92 = vector.extract_strided_slice %88 {offsets = [0, 32], sizes = [8, 32], strides = [1, 1]} : vector<8x96xf32> to vector<8x32xf32>
    %93 = vector.extract_strided_slice %88 {offsets = [0, 64], sizes = [8, 32], strides = [1, 1]} : vector<8x96xf32> to vector<8x32xf32>
    %94 = arith.mulf %92, %75 : vector<8x32xf32>
    %95 = arith.mulf %91, %90 : vector<8x32xf32>
    %96 = arith.addf %94, %95 : vector<8x32xf32>
    %97 = math.tanh %96 : vector<8x32xf32>
    %98 = arith.mulf %93, %97 : vector<8x32xf32>
    %c4_i32 = arith.constant 4 : i32
    %99 = arith.index_cast %c4_i32 : i32 to index
    %c0_33 = arith.constant 0 : index
    %c0_34 = arith.constant 0 : index
    %100 = vector.load %arg10[%99, %c0_33, %c0_34] : memref<8x8x128xf32, #tpu.memory_space<vmem>>, vector<1x8x128xf32>
    %101 = vector.shape_cast %100 : vector<1x8x128xf32> to vector<8x128xf32>
    %cst_35 = arith.constant dense<0.000000e+00> : vector<8x128xf32>
    %102 = tpu.matmul %98, %3, %cst_35 {dimension_numbers = #tpu.dot_dimension_numbers<[1], [0], [0], [1], [0, 0, 1, 1], [], []>} : vector<8x32xf32>, vector<32x128xf32>, vector<8x128xf32> -> vector<8x128xf32>
    %103 = arith.addf %101, %102 : vector<8x128xf32>
    %104 = vector.extract_strided_slice %103 {offsets = [0, 0], sizes = [8, 96], strides = [1, 1]} : vector<8x128xf32> to vector<8x96xf32>
    %105 = arith.negf %104 : vector<8x96xf32>
    %106 = math.exp %105 : vector<8x96xf32>
    %cst_36 = arith.constant 1.000000e+00 : f32
    %107 = vector.broadcast %cst_36 : f32 to vector<8x96xf32>
    %108 = arith.addf %107, %106 : vector<8x96xf32>
    %109 = arith.divf %107, %108 : vector<8x96xf32>
    %110 = vector.extract_strided_slice %103 {offsets = [0, 96], sizes = [8, 32], strides = [1, 1]} : vector<8x128xf32> to vector<8x32xf32>
    %111 = math.tanh %110 : vector<8x32xf32>
    %112 = vector.extract_strided_slice %109 {offsets = [0, 0], sizes = [8, 32], strides = [1, 1]} : vector<8x96xf32> to vector<8x32xf32>
    %113 = vector.extract_strided_slice %109 {offsets = [0, 32], sizes = [8, 32], strides = [1, 1]} : vector<8x96xf32> to vector<8x32xf32>
    %114 = vector.extract_strided_slice %109 {offsets = [0, 64], sizes = [8, 32], strides = [1, 1]} : vector<8x96xf32> to vector<8x32xf32>
    %115 = arith.mulf %113, %96 : vector<8x32xf32>
    %116 = arith.mulf %112, %111 : vector<8x32xf32>
    %117 = arith.addf %115, %116 : vector<8x32xf32>
    %118 = math.tanh %117 : vector<8x32xf32>
    %119 = arith.mulf %114, %118 : vector<8x32xf32>
    %c5_i32 = arith.constant 5 : i32
    %120 = arith.index_cast %c5_i32 : i32 to index
    %c0_37 = arith.constant 0 : index
    %c0_38 = arith.constant 0 : index
    %121 = vector.load %arg10[%120, %c0_37, %c0_38] : memref<8x8x128xf32, #tpu.memory_space<vmem>>, vector<1x8x128xf32>
    %122 = vector.shape_cast %121 : vector<1x8x128xf32> to vector<8x128xf32>
    %cst_39 = arith.constant dense<0.000000e+00> : vector<8x128xf32>
    %123 = tpu.matmul %119, %3, %cst_39 {dimension_numbers = #tpu.dot_dimension_numbers<[1], [0], [0], [1], [0, 0, 1, 1], [], []>} : vector<8x32xf32>, vector<32x128xf32>, vector<8x128xf32> -> vector<8x128xf32>
    %124 = arith.addf %122, %123 : vector<8x128xf32>
    %125 = vector.extract_strided_slice %124 {offsets = [0, 0], sizes = [8, 96], strides = [1, 1]} : vector<8x128xf32> to vector<8x96xf32>
    %126 = arith.negf %125 : vector<8x96xf32>
    %127 = math.exp %126 : vector<8x96xf32>
    %cst_40 = arith.constant 1.000000e+00 : f32
    %128 = vector.broadcast %cst_40 : f32 to vector<8x96xf32>
    %129 = arith.addf %128, %127 : vector<8x96xf32>
    %130 = arith.divf %128, %129 : vector<8x96xf32>
    %131 = vector.extract_strided_slice %124 {offsets = [0, 96], sizes = [8, 32], strides = [1, 1]} : vector<8x128xf32> to vector<8x32xf32>
    %132 = math.tanh %131 : vector<8x32xf32>
    %133 = vector.extract_strided_slice %130 {offsets = [0, 0], sizes = [8, 32], strides = [1, 1]} : vector<8x96xf32> to vector<8x32xf32>
    %134 = vector.extract_strided_slice %130 {offsets = [0, 32], sizes = [8, 32], strides = [1, 1]} : vector<8x96xf32> to vector<8x32xf32>
    %135 = vector.extract_strided_slice %130 {offsets = [0, 64], sizes = [8, 32], strides = [1, 1]} : vector<8x96xf32> to vector<8x32xf32>
    %136 = arith.mulf %134, %117 : vector<8x32xf32>
    %137 = arith.mulf %133, %132 : vector<8x32xf32>
    %138 = arith.addf %136, %137 : vector<8x32xf32>
    %139 = math.tanh %138 : vector<8x32xf32>
    %140 = arith.mulf %135, %139 : vector<8x32xf32>
    %c6_i32 = arith.constant 6 : i32
    %141 = arith.index_cast %c6_i32 : i32 to index
    %c0_41 = arith.constant 0 : index
    %c0_42 = arith.constant 0 : index
    %142 = vector.load %arg10[%141, %c0_41, %c0_42] : memref<8x8x128xf32, #tpu.memory_space<vmem>>, vector<1x8x128xf32>
    %143 = vector.shape_cast %142 : vector<1x8x128xf32> to vector<8x128xf32>
    %cst_43 = arith.constant dense<0.000000e+00> : vector<8x128xf32>
    %144 = tpu.matmul %140, %3, %cst_43 {dimension_numbers = #tpu.dot_dimension_numbers<[1], [0], [0], [1], [0, 0, 1, 1], [], []>} : vector<8x32xf32>, vector<32x128xf32>, vector<8x128xf32> -> vector<8x128xf32>
    %145 = arith.addf %143, %144 : vector<8x128xf32>
    %146 = vector.extract_strided_slice %145 {offsets = [0, 0], sizes = [8, 96], strides = [1, 1]} : vector<8x128xf32> to vector<8x96xf32>
    %147 = arith.negf %146 : vector<8x96xf32>
    %148 = math.exp %147 : vector<8x96xf32>
    %cst_44 = arith.constant 1.000000e+00 : f32
    %149 = vector.broadcast %cst_44 : f32 to vector<8x96xf32>
    %150 = arith.addf %149, %148 : vector<8x96xf32>
    %151 = arith.divf %149, %150 : vector<8x96xf32>
    %152 = vector.extract_strided_slice %145 {offsets = [0, 96], sizes = [8, 32], strides = [1, 1]} : vector<8x128xf32> to vector<8x32xf32>
    %153 = math.tanh %152 : vector<8x32xf32>
    %154 = vector.extract_strided_slice %151 {offsets = [0, 0], sizes = [8, 32], strides = [1, 1]} : vector<8x96xf32> to vector<8x32xf32>
    %155 = vector.extract_strided_slice %151 {offsets = [0, 32], sizes = [8, 32], strides = [1, 1]} : vector<8x96xf32> to vector<8x32xf32>
    %156 = vector.extract_strided_slice %151 {offsets = [0, 64], sizes = [8, 32], strides = [1, 1]} : vector<8x96xf32> to vector<8x32xf32>
    %157 = arith.mulf %155, %138 : vector<8x32xf32>
    %158 = arith.mulf %154, %153 : vector<8x32xf32>
    %159 = arith.addf %157, %158 : vector<8x32xf32>
    %160 = math.tanh %159 : vector<8x32xf32>
    %161 = arith.mulf %156, %160 : vector<8x32xf32>
    %c7_i32 = arith.constant 7 : i32
    %162 = arith.index_cast %c7_i32 : i32 to index
    %c0_45 = arith.constant 0 : index
    %c0_46 = arith.constant 0 : index
    %163 = vector.load %arg10[%162, %c0_45, %c0_46] : memref<8x8x128xf32, #tpu.memory_space<vmem>>, vector<1x8x128xf32>
    %164 = vector.shape_cast %163 : vector<1x8x128xf32> to vector<8x128xf32>
    %cst_47 = arith.constant dense<0.000000e+00> : vector<8x128xf32>
    %165 = tpu.matmul %161, %3, %cst_47 {dimension_numbers = #tpu.dot_dimension_numbers<[1], [0], [0], [1], [0, 0, 1, 1], [], []>} : vector<8x32xf32>, vector<32x128xf32>, vector<8x128xf32> -> vector<8x128xf32>
    %166 = arith.addf %164, %165 : vector<8x128xf32>
    %167 = vector.extract_strided_slice %166 {offsets = [0, 0], sizes = [8, 96], strides = [1, 1]} : vector<8x128xf32> to vector<8x96xf32>
    %168 = arith.negf %167 : vector<8x96xf32>
    %169 = math.exp %168 : vector<8x96xf32>
    %cst_48 = arith.constant 1.000000e+00 : f32
    %170 = vector.broadcast %cst_48 : f32 to vector<8x96xf32>
    %171 = arith.addf %170, %169 : vector<8x96xf32>
    %172 = arith.divf %170, %171 : vector<8x96xf32>
    %173 = vector.extract_strided_slice %166 {offsets = [0, 96], sizes = [8, 32], strides = [1, 1]} : vector<8x128xf32> to vector<8x32xf32>
    %174 = math.tanh %173 : vector<8x32xf32>
    %175 = vector.extract_strided_slice %172 {offsets = [0, 0], sizes = [8, 32], strides = [1, 1]} : vector<8x96xf32> to vector<8x32xf32>
    %176 = vector.extract_strided_slice %172 {offsets = [0, 32], sizes = [8, 32], strides = [1, 1]} : vector<8x96xf32> to vector<8x32xf32>
    %177 = vector.extract_strided_slice %172 {offsets = [0, 64], sizes = [8, 32], strides = [1, 1]} : vector<8x96xf32> to vector<8x32xf32>
    %178 = arith.mulf %176, %159 : vector<8x32xf32>
    %179 = arith.mulf %175, %174 : vector<8x32xf32>
    %180 = arith.addf %178, %179 : vector<8x32xf32>
    %181 = math.tanh %180 : vector<8x32xf32>
    %182 = arith.mulf %177, %181 : vector<8x32xf32>
    %c8_i32 = arith.constant 8 : i32
    %c0_49 = arith.constant 0 : index
    %c0_50 = arith.constant 0 : index
    %183 = vector.load %arg8[%c0_49, %c0_50] : memref<8x32xf32, #tpu.memory_space<vmem>>, vector<8x32xf32>
    tpu.vector_store %arg8[%c0_49, %c0_50], %182 {strides = array<i32>} : memref<8x32xf32, #tpu.memory_space<vmem>>, vector<8x32xf32>,
    %c0_51 = arith.constant 0 : index
    %c0_52 = arith.constant 0 : index
    %184 = vector.load %arg9[%c0_51, %c0_52] : memref<8x32xf32, #tpu.memory_space<vmem>>, vector<8x32xf32>
    tpu.vector_store %arg9[%c0_51, %c0_52], %180 {strides = array<i32>} : memref<8x32xf32, #tpu.memory_space<vmem>>, vector<8x32xf32>,
    %c0_i32_53 = arith.constant 0 : i32
    %185 = arith.cmpi eq, %arg1, %c0_i32_53 : i32
    %186 = arith.extui %185 : i1 to i32
    %c0_i32_54 = arith.constant 0 : i32
    %187 = arith.cmpi ne, %186, %c0_i32_54 : i32
    scf.if %187 {
      %c0_55 = arith.constant 0 : index
      %c0_56 = arith.constant 0 : index
      %188 = vector.load %arg6[%c0_55, %c0_56] : memref<8x32xf32, #tpu.memory_space<vmem>>, vector<8x32xf32>
      tpu.vector_store %arg6[%c0_55, %c0_56], %182 {strides = array<i32>} : memref<8x32xf32, #tpu.memory_space<vmem>>, vector<8x32xf32>,
      %c0_57 = arith.constant 0 : index
      %c0_58 = arith.constant 0 : index
      %189 = vector.load %arg7[%c0_57, %c0_58] : memref<8x32xf32, #tpu.memory_space<vmem>>, vector<8x32xf32>
      tpu.vector_store %arg7[%c0_57, %c0_58], %180 {strides = array<i32>} : memref<8x32xf32, #tpu.memory_space<vmem>>, vector<8x32xf32>,
    } else {
    }
    return
  }
  func.func @transform_0(%arg0: i32, %arg1: i32) -> (i32, i32, i32) {
    %c0_i32 = arith.constant 0 : i32
    %c0_i32_0 = arith.constant 0 : i32
    return %arg1, %arg0, %c0_i32 : i32, i32, i32
  }
  func.func @transform_1(%arg0: i32, %arg1: i32) -> (i32, i32) {
    %c0_i32 = arith.constant 0 : i32
    %c0_i32_0 = arith.constant 0 : i32
    %c0_i32_1 = arith.constant 0 : i32
    return %c0_i32, %c0_i32_0 : i32, i32
  }
  func.func @transform_2(%arg0: i32, %arg1: i32) -> (i32, i32) {
    %c0_i32 = arith.constant 0 : i32
    %c0_i32_0 = arith.constant 0 : i32
    %c0_i32_1 = arith.constant 0 : i32
    return %c0_i32, %c0_i32_0 : i32, i32
  }
  func.func @transform_3(%arg0: i32, %arg1: i32) -> (i32, i32) {
    %c0_i32 = arith.constant 0 : i32
    %c0_i32_0 = arith.constant 0 : i32
    %c0_i32_1 = arith.constant 0 : i32
    return %c0_i32, %c0_i32_0 : i32, i32
  }
  func.func @transform_4(%arg0: i32, %arg1: i32) -> (i32, i32) {
    %c0_i32 = arith.constant 0 : i32
    %c0_i32_0 = arith.constant 0 : i32
    return %arg0, %c0_i32 : i32, i32
  }
  func.func @transform_5(%arg0: i32, %arg1: i32) -> (i32, i32) {
    %c0_i32 = arith.constant 0 : i32
    %c0_i32_0 = arith.constant 0 : i32
    return %arg0, %c0_i32 : i32, i32
  }
}

</mosaic_0001>

<llo_original>
// kernel: encoder_forward.2
$region0: #{encoder_forward.2}
  #allocation0 [shape = 'u32[]', space=smem, size = 0x4, offset = 0x4, fixed_abs, tag = 'smem constant byte address 0x4 - core index']
  #allocation1 [shape = 'u32[144,128]{1,0:T(1,128)}', space=vmem, size = 0x12000, scoped, tag = 'internal scratch']
  #allocation2 [shape = 'f32[8,32]{1,0:T(8,128)}', space=vmem, size = 0x1000, scoped, tag = 'scratch operand']
  #allocation3 [shape = 'f32[8,32]{1,0:T(8,128)}', space=vmem, size = 0x1000, scoped, tag = 'scratch operand']
  %s0 = inlined_call_operand.vmem [shape: f32[8,8,128], index: 0, kind: input, shape index: {}]
  %s1 = inlined_call_operand.vmem [shape: f32[32,128], index: 1, kind: input, shape index: {}]
  %s2 = inlined_call_operand.vmem [shape: f32[8,8,32], index: 2, kind: output, shape index: {0}]
  %s3 = inlined_call_operand.vmem [shape: f32[8,32], index: 3, kind: output, shape index: {1}]
  %s4 = inlined_call_operand.vmem [shape: f32[8,32], index: 4, kind: output, shape index: {2}]
  %5 = xla_tuple %s2, %s3, %s4
  %s6 = sld [smem:[#allocation0]]
  $region42: #{encoder_forward.2} parent=0
    _
  %s8 = ssub.s32 1, %s6
  %s9 = scalar_select 0, %s8, %s6
  // Predicated region
  $region2: #{encoder_forward.2} parent=0 // pred_check
    _
  $region3: #{encoder_forward.2} parent=0 // pred_check_branch
    %11 = sbr.rel (0) target = $region5
  $region4: #{encoder_forward.2} parent=0 // pred_region
    _
  $region5: #{encoder_forward.2} parent=0 // pred_fallthru
    _
  // Predicated region
  $region6: #{encoder_forward.2} parent=0 // pred_check
    _
  $region7: #{encoder_forward.2} parent=0 // pred_check_branch
    %13 = sbr.rel (0) target = $region9
  $region8: #{encoder_forward.2} parent=0 // pred_region
    _
  $region9: #{encoder_forward.2} parent=0 // pred_fallthru
    _
  %p14 = scmp.eq.s32.totalorder 0, 0
  // Predicated region
  $region10: #{encoder_forward.2} parent=0 // pred_check
    %p15 = pneg %p14
  $region11: #{encoder_forward.2} parent=0 // pred_check_branch
    %17 = sbr.rel (%p15) target = $region13
  $region12: #{encoder_forward.2} parent=0 // pred_region
    %vm18 = vcmask 261120
    %19 = vst.msk [vmem:[#allocation2] sm:$0xff] %vm18, 0.0
    %20 = vst.msk [vmem:[#allocation3] sm:$0xff] %vm18, 0.0
  $region13: #{encoder_forward.2} parent=0 // pred_fallthru
    _
  %v21 = vld [vmem:[%s1] sm:$0xff]
  %v22 = vld [vmem:[%s1 + $0x8] sm:$0xff]
  %v23 = vld [vmem:[%s1 + $0x10] sm:$0xff]
  %v24 = vld [vmem:[%s1 + $0x18] sm:$0xff]
  %v25 = vld [vmem:[#allocation2] sm:$0xff]
  %v26 = vld [vmem:[#allocation3] sm:$0xff]
  %v27 = vld [vmem:[%s0] sm:$0xff]
  %vm28 = vcmask 261120
  %v30 = vsel %vm28, %v25, 0
  %32 = vmatprep.subr.mxu0 0.0
  %33 = vmatpush1.msra.mxu0 0.0
  %34 = vmatprep.subr.mxu0 0.0
  %35 = vmatpush1.msra.mxu0 0.0
  %36 = vmatprep.subr.mxu0 0.0
  %37 = vmatpush1.msra.mxu0 0.0
  %38 = vmatprep.subr.mxu0 0.0
  %39 = vmatpush1.msra.mxu0 0.0
  %40 = vmatprep.subr.mxu0 0.0
  %41 = vmatpush1.msra.mxu0 0.0
  %42 = vmatprep.subr.mxu0 0.0
  %43 = vmatpush1.msra.mxu0 0.0
  %44 = vmatprep.subr.mxu0 0.0
  %45 = vmatpush1.msra.mxu0 0.0
  %46 = vmatprep.subr.mxu0 0.0
  %47 = vmatpush1.msra.mxu0 0.0
  %48 = vmatprep.subr.mxu0 0.0
  %49 = vmatpush1.msra.mxu0 0.0
  %50 = vmatprep.subr.mxu0 0.0
  %51 = vmatpush1.msra.mxu0 0.0
  %52 = vmatprep.subr.mxu0 0.0
  %53 = vmatpush1.msra.mxu0 0.0
  %54 = vmatprep.subr.mxu0 0.0
  %55 = vmatpush1.msra.mxu0 0.0
  %56 = vmatprep.subr.mxu0 0.0
  %57 = vmatpush1.msra.mxu0 %v24
  %58 = vmatprep.subr.mxu0 0.0
  %59 = vmatpush1.msra.mxu0 %v23
  %60 = vmatprep.subr.mxu0 0.0
  %61 = vmatpush1.msra.mxu0 %v22
  %62 = vmatprep.subr.mxu0 0.0
  %63 = vmatpush1.msra.mxu0 %v21
  %64 = vmatprep.subr.mxu0 0.0
  %65 = vmatpush2.msra.mxu0 0.0
  %66 = vmatprep.subr.mxu0 0.0
  %67 = vmatpush2.msra.mxu0 0.0
  %68 = vmatprep.subr.mxu0 0.0
  %69 = vmatpush2.msra.mxu0 0.0
  %70 = vmatprep.subr.mxu0 0.0
  %71 = vmatpush2.msra.mxu0 0.0
  %72 = vmatprep.subr.mxu0 0.0
  %73 = vmatpush2.msra.mxu0 0.0
  %74 = vmatprep.subr.mxu0 0.0
  %75 = vmatpush2.msra.mxu0 0.0
  %76 = vmatprep.subr.mxu0 0.0
  %77 = vmatpush2.msra.mxu0 0.0
  %78 = vmatprep.subr.mxu0 0.0
  %79 = vmatpush2.msra.mxu0 0.0
  %80 = vmatprep.subr.mxu0 0.0
  %81 = vmatpush2.msra.mxu0 0.0
  %82 = vmatprep.subr.mxu0 0.0
  %83 = vmatpush2.msra.mxu0 0.0
  %84 = vmatprep.subr.mxu0 0.0
  %85 = vmatpush2.msra.mxu0 0.0
  %86 = vmatprep.subr.mxu0 0.0
  %87 = vmatpush2.msra.mxu0 0.0
  %88 = vmatprep.subr.mxu0 0.0
  %89 = vmatpush2.msra.mxu0 0.0
  %90 = vmatprep.subr.mxu0 0.0
  %91 = vmatpush2.msra.mxu0 0.0
  %92 = vmatprep.subr.mxu0 0.0
  %93 = vmatpush2.msra.mxu0 0.0
  %94 = vmatprep.subr.mxu0 0.0
  %95 = vmatpush2.msra.mxu0 0.0
  %96 = vmatprep.mubr.f32.mxu0 0.0
  %97 = vmatmul.mubr.f32.gmra.mxu0 %v30
  %v98 = vpop.f32.mrf.mxu0
  %v99 = vadd.f32 0.0, %v98
  %v100 = vpop.f32.mrf.mxu0
  %101 = vdwg.mxu0
  %v102 = vadd.f32 %v27, %v99
  %v103 = vxor.u32 %v102, 2147483648
  %v104 = vmul.f32 %v103, 1.442695
  %v105 = vpow.pop %v104
  %v106 = vadd.f32 %v105, 1.0
  %v107 = vrcp.pop %v106
  %v108 = vmul.f32 1.0, %v107
  %v109 = vtanh.pop %v102
  %111 = vrot.lane.b32.xlu0 %v26, 32
  %v112 = vpop.permute.xlu0 %111
  %v114 = vmul.f32 %v108, %v112
  %116 = vrot.lane.b32.xlu0 %v109, 32
  %v117 = vpop.permute.xlu0 %116
  %v119 = vmul.f32 %v108, %v117
  %121 = vrot.lane.b32.xlu0 %v119, 32
  %v122 = vpop.permute.xlu0 %121
  %v124 = vadd.f32 %v114, %v122
  %v125 = vtanh.pop %v124
  %127 = vrot.lane.b32.xlu0 %v125, 32
  %v128 = vpop.permute.xlu0 %127
  %v130 = vmul.f32 %v108, %v128
  %132 = vrot.lane.b32.xlu0 %v130, 64
  %v133 = vpop.permute.xlu0 %132
  %135 = vst.msk [vmem:[%s2] sm:$0xff] %vm28, %v133
  %s136 = scalar_lea.vmem %s0, 8
  %v137 = vld [vmem:[%s136] sm:$0xff]
  %v138 = vsel %vm28, %v133, 0
  %140 = vmatprep.subr.mxu0 0.0
  %141 = vmatpush1.msra.mxu0 0.0
  %142 = vmatprep.subr.mxu0 0.0
  %143 = vmatpush1.msra.mxu0 0.0
  %144 = vmatprep.subr.mxu0 0.0
  %145 = vmatpush1.msra.mxu0 0.0
  %146 = vmatprep.subr.mxu0 0.0
  %147 = vmatpush1.msra.mxu0 0.0
  %148 = vmatprep.subr.mxu0 0.0
  %149 = vmatpush1.msra.mxu0 0.0
  %150 = vmatprep.subr.mxu0 0.0
  %151 = vmatpush1.msra.mxu0 0.0
  %152 = vmatprep.subr.mxu0 0.0
  %153 = vmatpush1.msra.mxu0 0.0
  %154 = vmatprep.subr.mxu0 0.0
  %155 = vmatpush1.msra.mxu0 0.0
  %156 = vmatprep.subr.mxu0 0.0
  %157 = vmatpush1.msra.mxu0 0.0
  %158 = vmatprep.subr.mxu0 0.0
  %159 = vmatpush1.msra.mxu0 0.0
  %160 = vmatprep.subr.mxu0 0.0
  %161 = vmatpush1.msra.mxu0 0.0
  %162 = vmatprep.subr.mxu0 0.0
  %163 = vmatpush1.msra.mxu0 0.0
  %164 = vmatprep.subr.mxu0 0.0
  %165 = vmatpush1.msra.mxu0 %v24
  %166 = vmatprep.subr.mxu0 0.0
  %167 = vmatpush1.msra.mxu0 %v23
  %168 = vmatprep.subr.mxu0 0.0
  %169 = vmatpush1.msra.mxu0 %v22
  %170 = vmatprep.subr.mxu0 0.0
  %171 = vmatpush1.msra.mxu0 %v21
  %172 = vmatprep.subr.mxu0 0.0
  %173 = vmatpush2.msra.mxu0 0.0
  %174 = vmatprep.subr.mxu0 0.0
  %175 = vmatpush2.msra.mxu0 0.0
  %176 = vmatprep.subr.mxu0 0.0
  %177 = vmatpush2.msra.mxu0 0.0
  %178 = vmatprep.subr.mxu0 0.0
  %179 = vmatpush2.msra.mxu0 0.0
  %180 = vmatprep.subr.mxu0 0.0
  %181 = vmatpush2.msra.mxu0 0.0
  %182 = vmatprep.subr.mxu0 0.0
  %183 = vmatpush2.msra.mxu0 0.0
  %184 = vmatprep.subr.mxu0 0.0
  %185 = vmatpush2.msra.mxu0 0.0
  %186 = vmatprep.subr.mxu0 0.0
  %187 = vmatpush2.msra.mxu0 0.0
  %188 = vmatprep.subr.mxu0 0.0
  %189 = vmatpush2.msra.mxu0 0.0
  %190 = vmatprep.subr.mxu0 0.0
  %191 = vmatpush2.msra.mxu0 0.0
  %192 = vmatprep.subr.mxu0 0.0
  %193 = vmatpush2.msra.mxu0 0.0
  %194 = vmatprep.subr.mxu0 0.0
  %195 = vmatpush2.msra.mxu0 0.0
  %196 = vmatprep.subr.mxu0 0.0
  %197 = vmatpush2.msra.mxu0 0.0
  %198 = vmatprep.subr.mxu0 0.0
  %199 = vmatpush2.msra.mxu0 0.0
  %200 = vmatprep.subr.mxu0 0.0
  %201 = vmatpush2.msra.mxu0 0.0
  %202 = vmatprep.subr.mxu0 0.0
  %203 = vmatpush2.msra.mxu0 0.0
  %204 = vmatprep.mubr.f32.mxu0 0.0
  %205 = vmatmul.mubr.f32.gmra.mxu0 %v138
  %v206 = vpop.f32.mrf.mxu0
  %v207 = vadd.f32 0.0, %v206
  %v208 = vpop.f32.mrf.mxu0
  %209 = vdwg.mxu0
  %v210 = vadd.f32 %v137, %v207
  %v211 = vxor.u32 %v210, 2147483648
  %v212 = vmul.f32 %v211, 1.442695
  %v213 = vpow.pop %v212
  %v214 = vadd.f32 %v213, 1.0
  %v215 = vrcp.pop %v214
  %v216 = vmul.f32 1.0, %v215
  %v217 = vtanh.pop %v210
  %v218 = vmul.f32 %v216, %v124
  %220 = vrot.lane.b32.xlu0 %v217, 32
  %v221 = vpop.permute.xlu0 %220
  %v223 = vmul.f32 %v216, %v221
  %225 = vrot.lane.b32.xlu0 %v223, 32
  %v226 = vpop.permute.xlu0 %225
  %v228 = vadd.f32 %v218, %v226
  %v229 = vtanh.pop %v228
  %231 = vrot.lane.b32.xlu0 %v229, 32
  %v232 = vpop.permute.xlu0 %231
  %v234 = vmul.f32 %v216, %v232
  %236 = vrot.lane.b32.xlu0 %v234, 64
  %v237 = vpop.permute.xlu0 %236
  %s239 = scalar_lea.vmem %s2, 8
  %240 = vst.msk [vmem:[%s239] sm:$0xff] %vm28, %v237
  %s241 = scalar_lea.vmem %s0, 16
  %v242 = vld [vmem:[%s241] sm:$0xff]
  %v243 = vsel %vm28, %v237, 0
  %245 = vmatprep.subr.mxu0 0.0
  %246 = vmatpush1.msra.mxu0 0.0
  %247 = vmatprep.subr.mxu0 0.0
  %248 = vmatpush1.msra.mxu0 0.0
  %249 = vmatprep.subr.mxu0 0.0
  %250 = vmatpush1.msra.mxu0 0.0
  %251 = vmatprep.subr.mxu0 0.0
  %252 = vmatpush1.msra.mxu0 0.0
  %253 = vmatprep.subr.mxu0 0.0
  %254 = vmatpush1.msra.mxu0 0.0
  %255 = vmatprep.subr.mxu0 0.0
  %256 = vmatpush1.msra.mxu0 0.0
  %257 = vmatprep.subr.mxu0 0.0
  %258 = vmatpush1.msra.mxu0 0.0
  %259 = vmatprep.subr.mxu0 0.0
  %260 = vmatpush1.msra.mxu0 0.0
  %261 = vmatprep.subr.mxu0 0.0
  %262 = vmatpush1.msra.mxu0 0.0
  %263 = vmatprep.subr.mxu0 0.0
  %264 = vmatpush1.msra.mxu0 0.0
  %265 = vmatprep.subr.mxu0 0.0
  %266 = vmatpush1.msra.mxu0 0.0
  %267 = vmatprep.subr.mxu0 0.0
  %268 = vmatpush1.msra.mxu0 0.0
  %269 = vmatprep.subr.mxu0 0.0
  %270 = vmatpush1.msra.mxu0 %v24
  %271 = vmatprep.subr.mxu0 0.0
  %272 = vmatpush1.msra.mxu0 %v23
  %273 = vmatprep.subr.mxu0 0.0
  %274 = vmatpush1.msra.mxu0 %v22
  %275 = vmatprep.subr.mxu0 0.0
  %276 = vmatpush1.msra.mxu0 %v21
  %277 = vmatprep.subr.mxu0 0.0
  %278 = vmatpush2.msra.mxu0 0.0
  %279 = vmatprep.subr.mxu0 0.0
  %280 = vmatpush2.msra.mxu0 0.0
  %281 = vmatprep.subr.mxu0 0.0
  %282 = vmatpush2.msra.mxu0 0.0
  %283 = vmatprep.subr.mxu0 0.0
  %284 = vmatpush2.msra.mxu0 0.0
  %285 = vmatprep.subr.mxu0 0.0
  %286 = vmatpush2.msra.mxu0 0.0
  %287 = vmatprep.subr.mxu0 0.0
  %288 = vmatpush2.msra.mxu0 0.0
  %289 = vmatprep.subr.mxu0 0.0
  %290 = vmatpush2.msra.mxu0 0.0
  %291 = vmatprep.subr.mxu0 0.0
  %292 = vmatpush2.msra.mxu0 0.0
  %293 = vmatprep.subr.mxu0 0.0
  %294 = vmatpush2.msra.mxu0 0.0
  %295 = vmatprep.subr.mxu0 0.0
  %296 = vmatpush2.msra.mxu0 0.0
  %297 = vmatprep.subr.mxu0 0.0
  %298 = vmatpush2.msra.mxu0 0.0
  %299 = vmatprep.subr.mxu0 0.0
  %300 = vmatpush2.msra.mxu0 0.0
  %301 = vmatprep.subr.mxu0 0.0
  %302 = vmatpush2.msra.mxu0 0.0
  %303 = vmatprep.subr.mxu0 0.0
  %304 = vmatpush2.msra.mxu0 0.0
  %305 = vmatprep.subr.mxu0 0.0
  %306 = vmatpush2.msra.mxu0 0.0
  %307 = vmatprep.subr.mxu0 0.0
  %308 = vmatpush2.msra.mxu0 0.0
  %309 = vmatprep.mubr.f32.mxu0 0.0
  %310 = vmatmul.mubr.f32.gmra.mxu0 %v243
  %v311 = vpop.f32.mrf.mxu0
  %v312 = vadd.f32 0.0, %v311
  %v313 = vpop.f32.mrf.mxu0
  %314 = vdwg.mxu0
  %v315 = vadd.f32 %v242, %v312
  %v316 = vxor.u32 %v315, 2147483648
  %v317 = vmul.f32 %v316, 1.442695
  %v318 = vpow.pop %v317
  %v319 = vadd.f32 %v318, 1.0
  %v320 = vrcp.pop %v319
  %v321 = vmul.f32 1.0, %v320
  %v322 = vtanh.pop %v315
  %v323 = vmul.f32 %v321, %v228
  %325 = vrot.lane.b32.xlu0 %v322, 32
  %v326 = vpop.permute.xlu0 %325
  %v328 = vmul.f32 %v321, %v326
  %330 = vrot.lane.b32.xlu0 %v328, 32
  %v331 = vpop.permute.xlu0 %330
  %v333 = vadd.f32 %v323, %v331
  %v334 = vtanh.pop %v333
  %336 = vrot.lane.b32.xlu0 %v334, 32
  %v337 = vpop.permute.xlu0 %336
  %v339 = vmul.f32 %v321, %v337
  %341 = vrot.lane.b32.xlu0 %v339, 64
  %v342 = vpop.permute.xlu0 %341
  %s344 = scalar_lea.vmem %s2, 16
  %345 = vst.msk [vmem:[%s344] sm:$0xff] %vm28, %v342
  %s346 = scalar_lea.vmem %s0, 24
  %v347 = vld [vmem:[%s346] sm:$0xff]
  %v348 = vsel %vm28, %v342, 0
  %350 = vmatprep.subr.mxu0 0.0
  %351 = vmatpush1.msra.mxu0 0.0
  %352 = vmatprep.subr.mxu0 0.0
  %353 = vmatpush1.msra.mxu0 0.0
  %354 = vmatprep.subr.mxu0 0.0
  %355 = vmatpush1.msra.mxu0 0.0
  %356 = vmatprep.subr.mxu0 0.0
  %357 = vmatpush1.msra.mxu0 0.0
  %358 = vmatprep.subr.mxu0 0.0
  %359 = vmatpush1.msra.mxu0 0.0
  %360 = vmatprep.subr.mxu0 0.0
  %361 = vmatpush1.msra.mxu0 0.0
  %362 = vmatprep.subr.mxu0 0.0
  %363 = vmatpush1.msra.mxu0 0.0
  %364 = vmatprep.subr.mxu0 0.0
  %365 = vmatpush1.msra.mxu0 0.0
  %366 = vmatprep.subr.mxu0 0.0
  %367 = vmatpush1.msra.mxu0 0.0
  %368 = vmatprep.subr.mxu0 0.0
  %369 = vmatpush1.msra.mxu0 0.0
  %370 = vmatprep.subr.mxu0 0.0
  %371 = vmatpush1.msra.mxu0 0.0
  %372 = vmatprep.subr.mxu0 0.0
  %373 = vmatpush1.msra.mxu0 0.0
  %374 = vmatprep.subr.mxu0 0.0
  %375 = vmatpush1.msra.mxu0 %v24
  %376 = vmatprep.subr.mxu0 0.0
  %377 = vmatpush1.msra.mxu0 %v23
  %378 = vmatprep.subr.mxu0 0.0
  %379 = vmatpush1.msra.mxu0 %v22
  %380 = vmatprep.subr.mxu0 0.0
  %381 = vmatpush1.msra.mxu0 %v21
  %382 = vmatprep.subr.mxu0 0.0
  %383 = vmatpush2.msra.mxu0 0.0
  %384 = vmatprep.subr.mxu0 0.0
  %385 = vmatpush2.msra.mxu0 0.0
  %386 = vmatprep.subr.mxu0 0.0
  %387 = vmatpush2.msra.mxu0 0.0
  %388 = vmatprep.subr.mxu0 0.0
  %389 = vmatpush2.msra.mxu0 0.0
  %390 = vmatprep.subr.mxu0 0.0
  %391 = vmatpush2.msra.mxu0 0.0
  %392 = vmatprep.subr.mxu0 0.0
  %393 = vmatpush2.msra.mxu0 0.0
  %394 = vmatprep.subr.mxu0 0.0
  %395 = vmatpush2.msra.mxu0 0.0
  %396 = vmatprep.subr.mxu0 0.0
  %397 = vmatpush2.msra.mxu0 0.0
  %398 = vmatprep.subr.mxu0 0.0
  %399 = vmatpush2.msra.mxu0 0.0
  %400 = vmatprep.subr.mxu0 0.0
  %401 = vmatpush2.msra.mxu0 0.0
  %402 = vmatprep.subr.mxu0 0.0
  %403 = vmatpush2.msra.mxu0 0.0
  %404 = vmatprep.subr.mxu0 0.0
  %405 = vmatpush2.msra.mxu0 0.0
  %406 = vmatprep.subr.mxu0 0.0
  %407 = vmatpush2.msra.mxu0 0.0
  %408 = vmatprep.subr.mxu0 0.0
  %409 = vmatpush2.msra.mxu0 0.0
  %410 = vmatprep.subr.mxu0 0.0
  %411 = vmatpush2.msra.mxu0 0.0
  %412 = vmatprep.subr.mxu0 0.0
  %413 = vmatpush2.msra.mxu0 0.0
  %414 = vmatprep.mubr.f32.mxu0 0.0
  %415 = vmatmul.mubr.f32.gmra.mxu0 %v348
  %v416 = vpop.f32.mrf.mxu0
  %v417 = vadd.f32 0.0, %v416
  %v418 = vpop.f32.mrf.mxu0
  %419 = vdwg.mxu0
  %v420 = vadd.f32 %v347, %v417
  %v421 = vxor.u32 %v420, 2147483648
  %v422 = vmul.f32 %v421, 1.442695
  %v423 = vpow.pop %v422
  %v424 = vadd.f32 %v423, 1.0
  %v425 = vrcp.pop %v424
  %v426 = vmul.f32 1.0, %v425
  %v427 = vtanh.pop %v420
  %v428 = vmul.f32 %v426, %v333
  %430 = vrot.lane.b32.xlu0 %v427, 32
  %v431 = vpop.permute.xlu0 %430
  %v433 = vmul.f32 %v426, %v431
  %435 = vrot.lane.b32.xlu0 %v433, 32
  %v436 = vpop.permute.xlu0 %435
  %v438 = vadd.f32 %v428, %v436
  %v439 = vtanh.pop %v438
  %441 = vrot.lane.b32.xlu0 %v439, 32
  %v442 = vpop.permute.xlu0 %441
  %v444 = vmul.f32 %v426, %v442
  %446 = vrot.lane.b32.xlu0 %v444, 64
  %v447 = vpop.permute.xlu0 %446
  %s449 = scalar_lea.vmem %s2, 24
  %450 = vst.msk [vmem:[%s449] sm:$0xff] %vm28, %v447
  %s451 = scalar_lea.vmem %s0, 32
  %v452 = vld [vmem:[%s451] sm:$0xff]
  %v453 = vsel %vm28, %v447, 0
  %455 = vmatprep.subr.mxu0 0.0
  %456 = vmatpush1.msra.mxu0 0.0
  %457 = vmatprep.subr.mxu0 0.0
  %458 = vmatpush1.msra.mxu0 0.0
  %459 = vmatprep.subr.mxu0 0.0
  %460 = vmatpush1.msra.mxu0 0.0
  %461 = vmatprep.subr.mxu0 0.0
  %462 = vmatpush1.msra.mxu0 0.0
  %463 = vmatprep.subr.mxu0 0.0
  %464 = vmatpush1.msra.mxu0 0.0
  %465 = vmatprep.subr.mxu0 0.0
  %466 = vmatpush1.msra.mxu0 0.0
  %467 = vmatprep.subr.mxu0 0.0
  %468 = vmatpush1.msra.mxu0 0.0
  %469 = vmatprep.subr.mxu0 0.0
  %470 = vmatpush1.msra.mxu0 0.0
  %471 = vmatprep.subr.mxu0 0.0
  %472 = vmatpush1.msra.mxu0 0.0
  %473 = vmatprep.subr.mxu0 0.0
  %474 = vmatpush1.msra.mxu0 0.0
  %475 = vmatprep.subr.mxu0 0.0
  %476 = vmatpush1.msra.mxu0 0.0
  %477 = vmatprep.subr.mxu0 0.0
  %478 = vmatpush1.msra.mxu0 0.0
  %479 = vmatprep.subr.mxu0 0.0
  %480 = vmatpush1.msra.mxu0 %v24
  %481 = vmatprep.subr.mxu0 0.0
  %482 = vmatpush1.msra.mxu0 %v23
  %483 = vmatprep.subr.mxu0 0.0
  %484 = vmatpush1.msra.mxu0 %v22
  %485 = vmatprep.subr.mxu0 0.0
  %486 = vmatpush1.msra.mxu0 %v21
  %487 = vmatprep.subr.mxu0 0.0
  %488 = vmatpush2.msra.mxu0 0.0
  %489 = vmatprep.subr.mxu0 0.0
  %490 = vmatpush2.msra.mxu0 0.0
  %491 = vmatprep.subr.mxu0 0.0
  %492 = vmatpush2.msra.mxu0 0.0
  %493 = vmatprep.subr.mxu0 0.0
  %494 = vmatpush2.msra.mxu0 0.0
  %495 = vmatprep.subr.mxu0 0.0
  %496 = vmatpush2.msra.mxu0 0.0
  %497 = vmatprep.subr.mxu0 0.0
  %498 = vmatpush2.msra.mxu0 0.0
  %499 = vmatprep.subr.mxu0 0.0
  %500 = vmatpush2.msra.mxu0 0.0
  %501 = vmatprep.subr.mxu0 0.0
  %502 = vmatpush2.msra.mxu0 0.0
  %503 = vmatprep.subr.mxu0 0.0
  %504 = vmatpush2.msra.mxu0 0.0
  %505 = vmatprep.subr.mxu0 0.0
  %506 = vmatpush2.msra.mxu0 0.0
  %507 = vmatprep.subr.mxu0 0.0
  %508 = vmatpush2.msra.mxu0 0.0
  %509 = vmatprep.subr.mxu0 0.0
  %510 = vmatpush2.msra.mxu0 0.0
  %511 = vmatprep.subr.mxu0 0.0
  %512 = vmatpush2.msra.mxu0 0.0
  %513 = vmatprep.subr.mxu0 0.0
  %514 = vmatpush2.msra.mxu0 0.0
  %515 = vmatprep.subr.mxu0 0.0
  %516 = vmatpush2.msra.mxu0 0.0
  %517 = vmatprep.subr.mxu0 0.0
  %518 = vmatpush2.msra.mxu0 0.0
  %519 = vmatprep.mubr.f32.mxu0 0.0
  %520 = vmatmul.mubr.f32.gmra.mxu0 %v453
  %v521 = vpop.f32.mrf.mxu0
  %v522 = vadd.f32 0.0, %v521
  %v523 = vpop.f32.mrf.mxu0
  %524 = vdwg.mxu0
  %v525 = vadd.f32 %v452, %v522
  %v526 = vxor.u32 %v525, 2147483648
  %v527 = vmul.f32 %v526, 1.442695
  %v528 = vpow.pop %v527
  %v529 = vadd.f32 %v528, 1.0
  %v530 = vrcp.pop %v529
  %v531 = vmul.f32 1.0, %v530
  %v532 = vtanh.pop %v525
  %v533 = vmul.f32 %v531, %v438
  %535 = vrot.lane.b32.xlu0 %v532, 32
  %v536 = vpop.permute.xlu0 %535
  %v538 = vmul.f32 %v531, %v536
  %540 = vrot.lane.b32.xlu0 %v538, 32
  %v541 = vpop.permute.xlu0 %540
  %v543 = vadd.f32 %v533, %v541
  %v544 = vtanh.pop %v543
  %546 = vrot.lane.b32.xlu0 %v544, 32
  %v547 = vpop.permute.xlu0 %546
  %v549 = vmul.f32 %v531, %v547
  %551 = vrot.lane.b32.xlu0 %v549, 64
  %v552 = vpop.permute.xlu0 %551
  %s554 = scalar_lea.vmem %s2, 32
  %555 = vst.msk [vmem:[%s554] sm:$0xff] %vm28, %v552
  %s556 = scalar_lea.vmem %s0, 40
  %v557 = vld [vmem:[%s556] sm:$0xff]
  %v558 = vsel %vm28, %v552, 0
  %560 = vmatprep.subr.mxu0 0.0
  %561 = vmatpush1.msra.mxu0 0.0
  %562 = vmatprep.subr.mxu0 0.0
  %563 = vmatpush1.msra.mxu0 0.0
  %564 = vmatprep.subr.mxu0 0.0
  %565 = vmatpush1.msra.mxu0 0.0
  %566 = vmatprep.subr.mxu0 0.0
  %567 = vmatpush1.msra.mxu0 0.0
  %568 = vmatprep.subr.mxu0 0.0
  %569 = vmatpush1.msra.mxu0 0.0
  %570 = vmatprep.subr.mxu0 0.0
  %571 = vmatpush1.msra.mxu0 0.0
  %572 = vmatprep.subr.mxu0 0.0
  %573 = vmatpush1.msra.mxu0 0.0
  %574 = vmatprep.subr.mxu0 0.0
  %575 = vmatpush1.msra.mxu0 0.0
  %576 = vmatprep.subr.mxu0 0.0
  %577 = vmatpush1.msra.mxu0 0.0
  %578 = vmatprep.subr.mxu0 0.0
  %579 = vmatpush1.msra.mxu0 0.0
  %580 = vmatprep.subr.mxu0 0.0
  %581 = vmatpush1.msra.mxu0 0.0
  %582 = vmatprep.subr.mxu0 0.0
  %583 = vmatpush1.msra.mxu0 0.0
  %584 = vmatprep.subr.mxu0 0.0
  %585 = vmatpush1.msra.mxu0 %v24
  %586 = vmatprep.subr.mxu0 0.0
  %587 = vmatpush1.msra.mxu0 %v23
  %588 = vmatprep.subr.mxu0 0.0
  %589 = vmatpush1.msra.mxu0 %v22
  %590 = vmatprep.subr.mxu0 0.0
  %591 = vmatpush1.msra.mxu0 %v21
  %592 = vmatprep.subr.mxu0 0.0
  %593 = vmatpush2.msra.mxu0 0.0
  %594 = vmatprep.subr.mxu0 0.0
  %595 = vmatpush2.msra.mxu0 0.0
  %596 = vmatprep.subr.mxu0 0.0
  %597 = vmatpush2.msra.mxu0 0.0
  %598 = vmatprep.subr.mxu0 0.0
  %599 = vmatpush2.msra.mxu0 0.0
  %600 = vmatprep.subr.mxu0 0.0
  %601 = vmatpush2.msra.mxu0 0.0
  %602 = vmatprep.subr.mxu0 0.0
  %603 = vmatpush2.msra.mxu0 0.0
  %604 = vmatprep.subr.mxu0 0.0
  %605 = vmatpush2.msra.mxu0 0.0
  %606 = vmatprep.subr.mxu0 0.0
  %607 = vmatpush2.msra.mxu0 0.0
  %608 = vmatprep.subr.mxu0 0.0
  %609 = vmatpush2.msra.mxu0 0.0
  %610 = vmatprep.subr.mxu0 0.0
  %611 = vmatpush2.msra.mxu0 0.0
  %612 = vmatprep.subr.mxu0 0.0
  %613 = vmatpush2.msra.mxu0 0.0
  %614 = vmatprep.subr.mxu0 0.0
  %615 = vmatpush2.msra.mxu0 0.0
  %616 = vmatprep.subr.mxu0 0.0
  %617 = vmatpush2.msra.mxu0 0.0
  %618 = vmatprep.subr.mxu0 0.0
  %619 = vmatpush2.msra.mxu0 0.0
  %620 = vmatprep.subr.mxu0 0.0
  %621 = vmatpush2.msra.mxu0 0.0
  %622 = vmatprep.subr.mxu0 0.0
  %623 = vmatpush2.msra.mxu0 0.0
  %624 = vmatprep.mubr.f32.mxu0 0.0
  %625 = vmatmul.mubr.f32.gmra.mxu0 %v558
  %v626 = vpop.f32.mrf.mxu0
  %v627 = vadd.f32 0.0, %v626
  %v628 = vpop.f32.mrf.mxu0
  %629 = vdwg.mxu0
  %v630 = vadd.f32 %v557, %v627
  %v631 = vxor.u32 %v630, 2147483648
  %v632 = vmul.f32 %v631, 1.442695
  %v633 = vpow.pop %v632
  %v634 = vadd.f32 %v633, 1.0
  %v635 = vrcp.pop %v634
  %v636 = vmul.f32 1.0, %v635
  %v637 = vtanh.pop %v630
  %v638 = vmul.f32 %v636, %v543
  %640 = vrot.lane.b32.xlu0 %v637, 32
  %v641 = vpop.permute.xlu0 %640
  %v643 = vmul.f32 %v636, %v641
  %645 = vrot.lane.b32.xlu0 %v643, 32
  %v646 = vpop.permute.xlu0 %645
  %v648 = vadd.f32 %v638, %v646
  %v649 = vtanh.pop %v648
  %651 = vrot.lane.b32.xlu0 %v649, 32
  %v652 = vpop.permute.xlu0 %651
  %v654 = vmul.f32 %v636, %v652
  %656 = vrot.lane.b32.xlu0 %v654, 64
  %v657 = vpop.permute.xlu0 %656
  %s659 = scalar_lea.vmem %s2, 40
  %660 = vst.msk [vmem:[%s659] sm:$0xff] %vm28, %v657
  %s661 = scalar_lea.vmem %s0, 48
  %v662 = vld [vmem:[%s661] sm:$0xff]
  %v663 = vsel %vm28, %v657, 0
  %665 = vmatprep.subr.mxu0 0.0
  %666 = vmatpush1.msra.mxu0 0.0
  %667 = vmatprep.subr.mxu0 0.0
  %668 = vmatpush1.msra.mxu0 0.0
  %669 = vmatprep.subr.mxu0 0.0
  %670 = vmatpush1.msra.mxu0 0.0
  %671 = vmatprep.subr.mxu0 0.0
  %672 = vmatpush1.msra.mxu0 0.0
  %673 = vmatprep.subr.mxu0 0.0
  %674 = vmatpush1.msra.mxu0 0.0
  %675 = vmatprep.subr.mxu0 0.0
  %676 = vmatpush1.msra.mxu0 0.0
  %677 = vmatprep.subr.mxu0 0.0
  %678 = vmatpush1.msra.mxu0 0.0
  %679 = vmatprep.subr.mxu0 0.0
  %680 = vmatpush1.msra.mxu0 0.0
  %681 = vmatprep.subr.mxu0 0.0
  %682 = vmatpush1.msra.mxu0 0.0
  %683 = vmatprep.subr.mxu0 0.0
  %684 = vmatpush1.msra.mxu0 0.0
  %685 = vmatprep.subr.mxu0 0.0
  %686 = vmatpush1.msra.mxu0 0.0
  %687 = vmatprep.subr.mxu0 0.0
  %688 = vmatpush1.msra.mxu0 0.0
  %689 = vmatprep.subr.mxu0 0.0
  %690 = vmatpush1.msra.mxu0 %v24
  %691 = vmatprep.subr.mxu0 0.0
  %692 = vmatpush1.msra.mxu0 %v23
  %693 = vmatprep.subr.mxu0 0.0
  %694 = vmatpush1.msra.mxu0 %v22
  %695 = vmatprep.subr.mxu0 0.0
  %696 = vmatpush1.msra.mxu0 %v21
  %697 = vmatprep.subr.mxu0 0.0
  %698 = vmatpush2.msra.mxu0 0.0
  %699 = vmatprep.subr.mxu0 0.0
  %700 = vmatpush2.msra.mxu0 0.0
  %701 = vmatprep.subr.mxu0 0.0
  %702 = vmatpush2.msra.mxu0 0.0
  %703 = vmatprep.subr.mxu0 0.0
  %704 = vmatpush2.msra.mxu0 0.0
  %705 = vmatprep.subr.mxu0 0.0
  %706 = vmatpush2.msra.mxu0 0.0
  %707 = vmatprep.subr.mxu0 0.0
  %708 = vmatpush2.msra.mxu0 0.0
  %709 = vmatprep.subr.mxu0 0.0
  %710 = vmatpush2.msra.mxu0 0.0
  %711 = vmatprep.subr.mxu0 0.0
  %712 = vmatpush2.msra.mxu0 0.0
  %713 = vmatprep.subr.mxu0 0.0
  %714 = vmatpush2.msra.mxu0 0.0
  %715 = vmatprep.subr.mxu0 0.0
  %716 = vmatpush2.msra.mxu0 0.0
  %717 = vmatprep.subr.mxu0 0.0
  %718 = vmatpush2.msra.mxu0 0.0
  %719 = vmatprep.subr.mxu0 0.0
  %720 = vmatpush2.msra.mxu0 0.0
  %721 = vmatprep.subr.mxu0 0.0
  %722 = vmatpush2.msra.mxu0 0.0
  %723 = vmatprep.subr.mxu0 0.0
  %724 = vmatpush2.msra.mxu0 0.0
  %725 = vmatprep.subr.mxu0 0.0
  %726 = vmatpush2.msra.mxu0 0.0
  %727 = vmatprep.subr.mxu0 0.0
  %728 = vmatpush2.msra.mxu0 0.0
  %729 = vmatprep.mubr.f32.mxu0 0.0
  %730 = vmatmul.mubr.f32.gmra.mxu0 %v663
  %v731 = vpop.f32.mrf.mxu0
  %v732 = vadd.f32 0.0, %v731
  %v733 = vpop.f32.mrf.mxu0
  %734 = vdwg.mxu0
  %v735 = vadd.f32 %v662, %v732
  %v736 = vxor.u32 %v735, 2147483648
  %v737 = vmul.f32 %v736, 1.442695
  %v738 = vpow.pop %v737
  %v739 = vadd.f32 %v738, 1.0
  %v740 = vrcp.pop %v739
  %v741 = vmul.f32 1.0, %v740
  %v742 = vtanh.pop %v735
  %v743 = vmul.f32 %v741, %v648
  %745 = vrot.lane.b32.xlu0 %v742, 32
  %v746 = vpop.permute.xlu0 %745
  %v748 = vmul.f32 %v741, %v746
  %750 = vrot.lane.b32.xlu0 %v748, 32
  %v751 = vpop.permute.xlu0 %750
  %v753 = vadd.f32 %v743, %v751
  %v754 = vtanh.pop %v753
  %756 = vrot.lane.b32.xlu0 %v754, 32
  %v757 = vpop.permute.xlu0 %756
  %v759 = vmul.f32 %v741, %v757
  %761 = vrot.lane.b32.xlu0 %v759, 64
  %v762 = vpop.permute.xlu0 %761
  %s764 = scalar_lea.vmem %s2, 48
  %765 = vst.msk [vmem:[%s764] sm:$0xff] %vm28, %v762
  %s766 = scalar_lea.vmem %s0, 56
  %v767 = vld [vmem:[%s766] sm:$0xff]
  %v768 = vsel %vm28, %v762, 0
  %770 = vmatprep.subr.mxu0 0.0
  %771 = vmatpush1.msra.mxu0 0.0
  %772 = vmatprep.subr.mxu0 0.0
  %773 = vmatpush1.msra.mxu0 0.0
  %774 = vmatprep.subr.mxu0 0.0
  %775 = vmatpush1.msra.mxu0 0.0
  %776 = vmatprep.subr.mxu0 0.0
  %777 = vmatpush1.msra.mxu0 0.0
  %778 = vmatprep.subr.mxu0 0.0
  %779 = vmatpush1.msra.mxu0 0.0
  %780 = vmatprep.subr.mxu0 0.0
  %781 = vmatpush1.msra.mxu0 0.0
  %782 = vmatprep.subr.mxu0 0.0
  %783 = vmatpush1.msra.mxu0 0.0
  %784 = vmatprep.subr.mxu0 0.0
  %785 = vmatpush1.msra.mxu0 0.0
  %786 = vmatprep.subr.mxu0 0.0
  %787 = vmatpush1.msra.mxu0 0.0
  %788 = vmatprep.subr.mxu0 0.0
  %789 = vmatpush1.msra.mxu0 0.0
  %790 = vmatprep.subr.mxu0 0.0
  %791 = vmatpush1.msra.mxu0 0.0
  %792 = vmatprep.subr.mxu0 0.0
  %793 = vmatpush1.msra.mxu0 0.0
  %794 = vmatprep.subr.mxu0 0.0
  %795 = vmatpush1.msra.mxu0 %v24
  %796 = vmatprep.subr.mxu0 0.0
  %797 = vmatpush1.msra.mxu0 %v23
  %798 = vmatprep.subr.mxu0 0.0
  %799 = vmatpush1.msra.mxu0 %v22
  %800 = vmatprep.subr.mxu0 0.0
  %801 = vmatpush1.msra.mxu0 %v21
  %802 = vmatprep.subr.mxu0 0.0
  %803 = vmatpush2.msra.mxu0 0.0
  %804 = vmatprep.subr.mxu0 0.0
  %805 = vmatpush2.msra.mxu0 0.0
  %806 = vmatprep.subr.mxu0 0.0
  %807 = vmatpush2.msra.mxu0 0.0
  %808 = vmatprep.subr.mxu0 0.0
  %809 = vmatpush2.msra.mxu0 0.0
  %810 = vmatprep.subr.mxu0 0.0
  %811 = vmatpush2.msra.mxu0 0.0
  %812 = vmatprep.subr.mxu0 0.0
  %813 = vmatpush2.msra.mxu0 0.0
  %814 = vmatprep.subr.mxu0 0.0
  %815 = vmatpush2.msra.mxu0 0.0
  %816 = vmatprep.subr.mxu0 0.0
  %817 = vmatpush2.msra.mxu0 0.0
  %818 = vmatprep.subr.mxu0 0.0
  %819 = vmatpush2.msra.mxu0 0.0
  %820 = vmatprep.subr.mxu0 0.0
  %821 = vmatpush2.msra.mxu0 0.0
  %822 = vmatprep.subr.mxu0 0.0
  %823 = vmatpush2.msra.mxu0 0.0
  %824 = vmatprep.subr.mxu0 0.0
  %825 = vmatpush2.msra.mxu0 0.0
  %826 = vmatprep.subr.mxu0 0.0
  %827 = vmatpush2.msra.mxu0 0.0
  %828 = vmatprep.subr.mxu0 0.0
  %829 = vmatpush2.msra.mxu0 0.0
  %830 = vmatprep.subr.mxu0 0.0
  %831 = vmatpush2.msra.mxu0 0.0
  %832 = vmatprep.subr.mxu0 0.0
  %833 = vmatpush2.msra.mxu0 0.0
  %834 = vmatprep.mubr.f32.mxu0 0.0
  %835 = vmatmul.mubr.f32.gmra.mxu0 %v768
  %v836 = vpop.f32.mrf.mxu0
  %v837 = vadd.f32 0.0, %v836
  %v838 = vpop.f32.mrf.mxu0
  %839 = vdwg.mxu0
  %v840 = vadd.f32 %v767, %v837
  %v841 = vxor.u32 %v840, 2147483648
  %v842 = vmul.f32 %v841, 1.442695
  %v843 = vpow.pop %v842
  %v844 = vadd.f32 %v843, 1.0
  %v845 = vrcp.pop %v844
  %v846 = vmul.f32 1.0, %v845
  %v847 = vtanh.pop %v840
  %v848 = vmul.f32 %v846, %v753
  %850 = vrot.lane.b32.xlu0 %v847, 32
  %v851 = vpop.permute.xlu0 %850
  %v853 = vmul.f32 %v846, %v851
  %855 = vrot.lane.b32.xlu0 %v853, 32
  %v856 = vpop.permute.xlu0 %855
  %v858 = vadd.f32 %v848, %v856
  %v859 = vtanh.pop %v858
  %861 = vrot.lane.b32.xlu0 %v859, 32
  %v862 = vpop.permute.xlu0 %861
  %v864 = vmul.f32 %v846, %v862
  %866 = vrot.lane.b32.xlu0 %v864, 64
  %v867 = vpop.permute.xlu0 %866
  %s869 = scalar_lea.vmem %s2, 56
  %870 = vst.msk [vmem:[%s869] sm:$0xff] %vm28, %v867
  %871 = vst.msk [vmem:[#allocation2] sm:$0xff] %vm28, %v867
  %873 = vrot.lane.b32.xlu0 %v858, 96
  %v874 = vpop.permute.xlu0 %873
  %876 = vst.msk [vmem:[#allocation3] sm:$0xff] %vm28, %v874
  // Predicated region
  $region14: #{encoder_forward.2} parent=0 // pred_check
    %p877 = pneg %p14
  $region15: #{encoder_forward.2} parent=0 // pred_check_branch
    %879 = sbr.rel (%p877) target = $region17
  $region16: #{encoder_forward.2} parent=0 // pred_region
    %880 = vst.msk [vmem:[%s3] sm:$0xff] %vm28, %v867
    %881 = vst.msk [vmem:[%s4] sm:$0xff] %vm28, %v874
  $region17: #{encoder_forward.2} parent=0 // pred_fallthru
    _
  // Predicated region
  $region18: #{encoder_forward.2} parent=0 // pred_check
    _
  $region19: #{encoder_forward.2} parent=0 // pred_check_branch
    %883 = sbr.rel (0) target = $region21
  $region20: #{encoder_forward.2} parent=0 // pred_region
    _
  $region21: #{encoder_forward.2} parent=0 // pred_fallthru
    _
  // Predicated region
  $region22: #{encoder_forward.2} parent=0 // pred_check
    _
  $region23: #{encoder_forward.2} parent=0 // pred_check_branch
    %885 = sbr.rel (0) target = $region25
  $region24: #{encoder_forward.2} parent=0 // pred_region
    _
  $region25: #{encoder_forward.2} parent=0 // pred_fallthru
    _
  // Predicated region
  $region26: #{encoder_forward.2} parent=0 // pred_check
    _
  $region27: #{encoder_forward.2} parent=0 // pred_check_branch
    %887 = sbr.rel (0) target = $region29
  $region28: #{encoder_forward.2} parent=0 // pred_region
    _
  $region29: #{encoder_forward.2} parent=0 // pred_fallthru
    _
  // Predicated region
  $region30: #{encoder_forward.2} parent=0 // pred_check
    _
  $region31: #{encoder_forward.2} parent=0 // pred_check_branch
    %889 = sbr.rel (0) target = $region33
  $region32: #{encoder_forward.2} parent=0 // pred_region
    _
  $region33: #{encoder_forward.2} parent=0 // pred_fallthru
    _
  // Predicated region
  $region34: #{encoder_forward.2} parent=0 // pred_check
    _
  $region35: #{encoder_forward.2} parent=0 // pred_check_branch
    %891 = sbr.rel (0) target = $region37
  $region36: #{encoder_forward.2} parent=0 // pred_region
    _
  $region37: #{encoder_forward.2} parent=0 // pred_fallthru
    _
  // Predicated region
  $region38: #{encoder_forward.2} parent=0 // pred_check
    _
  $region39: #{encoder_forward.2} parent=0 // pred_check_branch
    %893 = sbr.rel (0) target = $region41
  $region40: #{encoder_forward.2} parent=0 // pred_region
    _
  $region41: #{encoder_forward.2} parent=0 // pred_fallthru
    _

// kernel: encoder_forward.3
$region0: #{encoder_forward.3}
  #allocation0 [shape = 'u32[]', space=smem, size = 0x4, offset = 0x4, fixed_abs, tag = 'smem constant byte address 0x4 - core index']
  #allocation1 [shape = 'u32[144,128]{1,0:T(1,128)}', space=vmem, size = 0x12000, scoped, tag = 'internal scratch']
  #allocation2 [shape = 'f32[8,32]{1,0:T(8,128)}', space=vmem, size = 0x1000, scoped, tag = 'scratch operand']
  #allocation3 [shape = 'f32[8,32]{1,0:T(8,128)}', space=vmem, size = 0x1000, scoped, tag = 'scratch operand']
  #allocation4 [shape = 'f32[8,8,128]{2,1,0:T(8,128)}', space=vmem, size = 0x8000, scoped, tag = 'scratch operand']
  %s0 = inlined_call_operand.vmem [shape: f32[8,8,32], index: 0, kind: input, shape index: {}]
  %s1 = inlined_call_operand.vmem [shape: f32[32,128], index: 1, kind: input, shape index: {}]
  %s2 = inlined_call_operand.vmem [shape: f32[32,128], index: 2, kind: input, shape index: {}]
  %s3 = inlined_call_operand.vmem [shape: f32[1,128], index: 3, kind: input, shape index: {}]
  %s4 = inlined_call_operand.vmem [shape: f32[8,32], index: 4, kind: output, shape index: {0}]
  %s5 = inlined_call_operand.vmem [shape: f32[8,32], index: 5, kind: output, shape index: {1}]
  %6 = xla_tuple %s4, %s5
  %s7 = sld [smem:[#allocation0]]
  $region42: #{encoder_forward.3} parent=0
    _
  %s9 = ssub.s32 1, %s7
  %s10 = scalar_select 0, %s9, %s7
  // Predicated region
  $region2: #{encoder_forward.3} parent=0 // pred_check
    _
  $region3: #{encoder_forward.3} parent=0 // pred_check_branch
    %12 = sbr.rel (0) target = $region5
  $region4: #{encoder_forward.3} parent=0 // pred_region
    _
  $region5: #{encoder_forward.3} parent=0 // pred_fallthru
    _
  // Predicated region
  $region6: #{encoder_forward.3} parent=0 // pred_check
    _
  $region7: #{encoder_forward.3} parent=0 // pred_check_branch
    %14 = sbr.rel (0) target = $region9
  $region8: #{encoder_forward.3} parent=0 // pred_region
    _
  $region9: #{encoder_forward.3} parent=0 // pred_fallthru
    _
  // Predicated region
  $region10: #{encoder_forward.3} parent=0 // pred_check
    _
  $region11: #{encoder_forward.3} parent=0 // pred_check_branch
    %16 = sbr.rel (0) target = $region13
  $region12: #{encoder_forward.3} parent=0 // pred_region
    _
  $region13: #{encoder_forward.3} parent=0 // pred_fallthru
    _
  // Predicated region
  $region14: #{encoder_forward.3} parent=0 // pred_check
    _
  $region15: #{encoder_forward.3} parent=0 // pred_check_branch
    %18 = sbr.rel (0) target = $region17
  $region16: #{encoder_forward.3} parent=0 // pred_region
    _
  $region17: #{encoder_forward.3} parent=0 // pred_fallthru
    _
  %p19 = scmp.eq.s32.totalorder 0, 0
  // Predicated region
  $region18: #{encoder_forward.3} parent=0 // pred_check
    %p20 = pneg %p19
  $region19: #{encoder_forward.3} parent=0 // pred_check_branch
    %22 = sbr.rel (%p20) target = $region21
  $region20: #{encoder_forward.3} parent=0 // pred_region
    %vm23 = vcmask 261120
    %24 = vst.msk [vmem:[#allocation2] sm:$0xff] %vm23, 0.0
    %25 = vst.msk [vmem:[#allocation3] sm:$0xff] %vm23, 0.0
  $region21: #{encoder_forward.3} parent=0 // pred_fallthru
    _
  %v26 = vld [vmem:[%s2] sm:$0xff]
  %v27 = vld [vmem:[%s2 + $0x8] sm:$0xff]
  %v28 = vld [vmem:[%s2 + $0x10] sm:$0xff]
  %v29 = vld [vmem:[%s2 + $0x18] sm:$0xff]
  %v30 = vld [vmem:[%s0] sm:$0xff]
  %v31 = vld [vmem:[%s0 + $0x8] sm:$0xff]
  %v32 = vld [vmem:[%s0 + $0x10] sm:$0xff]
  %v33 = vld [vmem:[%s0 + $0x18] sm:$0xff]
  %v34 = vld [vmem:[%s0 + $0x20] sm:$0xff]
  %v35 = vld [vmem:[%s0 + $0x28] sm:$0xff]
  %v36 = vld [vmem:[%s0 + $0x30] sm:$0xff]
  %v37 = vld [vmem:[%s0 + $0x38] sm:$0xff]
  %v38 = vld [vmem:[%s1] sm:$0xff]
  %v39 = vld [vmem:[%s1 + $0x8] sm:$0xff]
  %v40 = vld [vmem:[%s1 + $0x10] sm:$0xff]
  %v41 = vld [vmem:[%s1 + $0x18] sm:$0xff]
  %v42 = vld [vmem:[%s3] sm:$0x1]
  %v44 = vlaneseq
  %v45 = vshrl.u32 %v44, 7
  %v46 = vsub.s32 0, %v45
  %v47 = vrot.slane %v42, %v46
  %vm49 = vcmask 261120
  %v51 = vsel %vm49, %v30, 0
  %v54 = vsel %vm49, %v31, 0
  %v57 = vsel %vm49, %v32, 0
  %v60 = vsel %vm49, %v33, 0
  %v63 = vsel %vm49, %v34, 0
  %v66 = vsel %vm49, %v35, 0
  %v69 = vsel %vm49, %v36, 0
  %v72 = vsel %vm49, %v37, 0
  %74 = vmatprep.subr.mxu0 0.0
  %75 = vmatpush1.msra.mxu0 0.0
  %76 = vmatprep.subr.mxu0 0.0
  %77 = vmatpush1.msra.mxu0 0.0
  %78 = vmatprep.subr.mxu0 0.0
  %79 = vmatpush1.msra.mxu0 0.0
  %80 = vmatprep.subr.mxu0 0.0
  %81 = vmatpush1.msra.mxu0 0.0
  %82 = vmatprep.subr.mxu0 0.0
  %83 = vmatpush1.msra.mxu0 0.0
  %84 = vmatprep.subr.mxu0 0.0
  %85 = vmatpush1.msra.mxu0 0.0
  %86 = vmatprep.subr.mxu0 0.0
  %87 = vmatpush1.msra.mxu0 0.0
  %88 = vmatprep.subr.mxu0 0.0
  %89 = vmatpush1.msra.mxu0 0.0
  %90 = vmatprep.subr.mxu0 0.0
  %91 = vmatpush1.msra.mxu0 0.0
  %92 = vmatprep.subr.mxu0 0.0
  %93 = vmatpush1.msra.mxu0 0.0
  %94 = vmatprep.subr.mxu0 0.0
  %95 = vmatpush1.msra.mxu0 0.0
  %96 = vmatprep.subr.mxu0 0.0
  %97 = vmatpush1.msra.mxu0 0.0
  %98 = vmatprep.subr.mxu0 0.0
  %99 = vmatpush1.msra.mxu0 %v41
  %100 = vmatprep.subr.mxu0 0.0
  %101 = vmatpush1.msra.mxu0 %v40
  %102 = vmatprep.subr.mxu0 0.0
  %103 = vmatpush1.msra.mxu0 %v39
  %104 = vmatprep.subr.mxu0 0.0
  %105 = vmatpush1.msra.mxu0 %v38
  %106 = vmatprep.subr.mxu0 0.0
  %107 = vmatpush2.msra.mxu0 0.0
  %108 = vmatprep.subr.mxu0 0.0
  %109 = vmatpush2.msra.mxu0 0.0
  %110 = vmatprep.subr.mxu0 0.0
  %111 = vmatpush2.msra.mxu0 0.0
  %112 = vmatprep.subr.mxu0 0.0
  %113 = vmatpush2.msra.mxu0 0.0
  %114 = vmatprep.subr.mxu0 0.0
  %115 = vmatpush2.msra.mxu0 0.0
  %116 = vmatprep.subr.mxu0 0.0
  %117 = vmatpush2.msra.mxu0 0.0
  %118 = vmatprep.subr.mxu0 0.0
  %119 = vmatpush2.msra.mxu0 0.0
  %120 = vmatprep.subr.mxu0 0.0
  %121 = vmatpush2.msra.mxu0 0.0
  %122 = vmatprep.subr.mxu0 0.0
  %123 = vmatpush2.msra.mxu0 0.0
  %124 = vmatprep.subr.mxu0 0.0
  %125 = vmatpush2.msra.mxu0 0.0
  %126 = vmatprep.subr.mxu0 0.0
  %127 = vmatpush2.msra.mxu0 0.0
  %128 = vmatprep.subr.mxu0 0.0
  %129 = vmatpush2.msra.mxu0 0.0
  %130 = vmatprep.subr.mxu0 0.0
  %131 = vmatpush2.msra.mxu0 0.0
  %132 = vmatprep.subr.mxu0 0.0
  %133 = vmatpush2.msra.mxu0 0.0
  %134 = vmatprep.subr.mxu0 0.0
  %135 = vmatpush2.msra.mxu0 0.0
  %136 = vmatprep.subr.mxu0 0.0
  %137 = vmatpush2.msra.mxu0 0.0
  %138 = vmatprep.mubr.f32.mxu0 0.0
  %139 = vmatmul.mubr.f32.gmra.mxu0 %v51
  %v140 = vpop.f32.mrf.mxu0
  %v141 = vadd.f32 %v47, %v140
  %v142 = vpop.f32.mrf.mxu0
  %143 = vmatprep.mubr.f32.mxu0 0.0
  %144 = vmatmul.mubr.f32.gmra.mxu0 %v54
  %v145 = vpop.f32.mrf.mxu0
  %v146 = vadd.f32 %v47, %v145
  %v147 = vpop.f32.mrf.mxu0
  %148 = vmatprep.mubr.f32.mxu0 0.0
  %149 = vmatmul.mubr.f32.gmra.mxu0 %v57
  %v150 = vpop.f32.mrf.mxu0
  %v151 = vadd.f32 %v47, %v150
  %v152 = vpop.f32.mrf.mxu0
  %153 = vmatprep.mubr.f32.mxu0 0.0
  %154 = vmatmul.mubr.f32.gmra.mxu0 %v60
  %v155 = vpop.f32.mrf.mxu0
  %v156 = vadd.f32 %v47, %v155
  %v157 = vpop.f32.mrf.mxu0
  %158 = vmatprep.mubr.f32.mxu0 0.0
  %159 = vmatmul.mubr.f32.gmra.mxu0 %v63
  %v160 = vpop.f32.mrf.mxu0
  %v161 = vadd.f32 %v47, %v160
  %v162 = vpop.f32.mrf.mxu0
  %163 = vmatprep.mubr.f32.mxu0 0.0
  %164 = vmatmul.mubr.f32.gmra.mxu0 %v66
  %v165 = vpop.f32.mrf.mxu0
  %v166 = vadd.f32 %v47, %v165
  %v167 = vpop.f32.mrf.mxu0
  %168 = vmatprep.mubr.f32.mxu0 0.0
  %169 = vmatmul.mubr.f32.gmra.mxu0 %v69
  %v170 = vpop.f32.mrf.mxu0
  %v171 = vadd.f32 %v47, %v170
  %v172 = vpop.f32.mrf.mxu0
  %173 = vmatprep.mubr.f32.mxu0 0.0
  %174 = vmatmul.mubr.f32.gmra.mxu0 %v72
  %v175 = vpop.f32.mrf.mxu0
  %v176 = vadd.f32 %v47, %v175
  %v177 = vpop.f32.mrf.mxu0
  %178 = vdwg.mxu0
  %179 = vst [vmem:[#allocation4] sm:$0xff] %v141
  %180 = vst [vmem:[#allocation4 + $0x8] sm:$0xff] %v146
  %181 = vst [vmem:[#allocation4 + $0x10] sm:$0xff] %v151
  %182 = vst [vmem:[#allocation4 + $0x18] sm:$0xff] %v156
  %183 = vst [vmem:[#allocation4 + $0x20] sm:$0xff] %v161
  %184 = vst [vmem:[#allocation4 + $0x28] sm:$0xff] %v166
  %185 = vst [vmem:[#allocation4 + $0x30] sm:$0xff] %v171
  %186 = vst [vmem:[#allocation4 + $0x38] sm:$0xff] %v176
  %v187 = vld [vmem:[#allocation2] sm:$0xff]
  %v188 = vld [vmem:[#allocation3] sm:$0xff]
  %v189 = vld [vmem:[#allocation4] sm:$0xff]
  %v191 = vsel %vm49, %v187, 0
  %193 = vmatprep.subr.mxu0 0.0
  %194 = vmatpush1.msra.mxu0 0.0
  %195 = vmatprep.subr.mxu0 0.0
  %196 = vmatpush1.msra.mxu0 0.0
  %197 = vmatprep.subr.mxu0 0.0
  %198 = vmatpush1.msra.mxu0 0.0
  %199 = vmatprep.subr.mxu0 0.0
  %200 = vmatpush1.msra.mxu0 0.0
  %201 = vmatprep.subr.mxu0 0.0
  %202 = vmatpush1.msra.mxu0 0.0
  %203 = vmatprep.subr.mxu0 0.0
  %204 = vmatpush1.msra.mxu0 0.0
  %205 = vmatprep.subr.mxu0 0.0
  %206 = vmatpush1.msra.mxu0 0.0
  %207 = vmatprep.subr.mxu0 0.0
  %208 = vmatpush1.msra.mxu0 0.0
  %209 = vmatprep.subr.mxu0 0.0
  %210 = vmatpush1.msra.mxu0 0.0
  %211 = vmatprep.subr.mxu0 0.0
  %212 = vmatpush1.msra.mxu0 0.0
  %213 = vmatprep.subr.mxu0 0.0
  %214 = vmatpush1.msra.mxu0 0.0
  %215 = vmatprep.subr.mxu0 0.0
  %216 = vmatpush1.msra.mxu0 0.0
  %217 = vmatprep.subr.mxu0 0.0
  %218 = vmatpush1.msra.mxu0 %v29
  %219 = vmatprep.subr.mxu0 0.0
  %220 = vmatpush1.msra.mxu0 %v28
  %221 = vmatprep.subr.mxu0 0.0
  %222 = vmatpush1.msra.mxu0 %v27
  %223 = vmatprep.subr.mxu0 0.0
  %224 = vmatpush1.msra.mxu0 %v26
  %225 = vmatprep.subr.mxu0 0.0
  %226 = vmatpush2.msra.mxu0 0.0
  %227 = vmatprep.subr.mxu0 0.0
  %228 = vmatpush2.msra.mxu0 0.0
  %229 = vmatprep.subr.mxu0 0.0
  %230 = vmatpush2.msra.mxu0 0.0
  %231 = vmatprep.subr.mxu0 0.0
  %232 = vmatpush2.msra.mxu0 0.0
  %233 = vmatprep.subr.mxu0 0.0
  %234 = vmatpush2.msra.mxu0 0.0
  %235 = vmatprep.subr.mxu0 0.0
  %236 = vmatpush2.msra.mxu0 0.0
  %237 = vmatprep.subr.mxu0 0.0
  %238 = vmatpush2.msra.mxu0 0.0
  %239 = vmatprep.subr.mxu0 0.0
  %240 = vmatpush2.msra.mxu0 0.0
  %241 = vmatprep.subr.mxu0 0.0
  %242 = vmatpush2.msra.mxu0 0.0
  %243 = vmatprep.subr.mxu0 0.0
  %244 = vmatpush2.msra.mxu0 0.0
  %245 = vmatprep.subr.mxu0 0.0
  %246 = vmatpush2.msra.mxu0 0.0
  %247 = vmatprep.subr.mxu0 0.0
  %248 = vmatpush2.msra.mxu0 0.0
  %249 = vmatprep.subr.mxu0 0.0
  %250 = vmatpush2.msra.mxu0 0.0
  %251 = vmatprep.subr.mxu0 0.0
  %252 = vmatpush2.msra.mxu0 0.0
  %253 = vmatprep.subr.mxu0 0.0
  %254 = vmatpush2.msra.mxu0 0.0
  %255 = vmatprep.subr.mxu0 0.0
  %256 = vmatpush2.msra.mxu0 0.0
  %257 = vmatprep.mubr.f32.mxu0 0.0
  %258 = vmatmul.mubr.f32.gmra.mxu0 %v191
  %v259 = vpop.f32.mrf.mxu0
  %v260 = vadd.f32 0.0, %v259
  %v261 = vpop.f32.mrf.mxu0
  %262 = vdwg.mxu0
  %v263 = vadd.f32 %v189, %v260
  %v264 = vxor.u32 %v263, 2147483648
  %v265 = vmul.f32 %v264, 1.442695
  %v266 = vpow.pop %v265
  %v267 = vadd.f32 %v266, 1.0
  %v268 = vrcp.pop %v267
  %v269 = vmul.f32 1.0, %v268
  %v270 = vtanh.pop %v263
  %272 = vrot.lane.b32.xlu0 %v188, 32
  %v273 = vpop.permute.xlu0 %272
  %v275 = vmul.f32 %v269, %v273
  %277 = vrot.lane.b32.xlu0 %v270, 32
  %v278 = vpop.permute.xlu0 %277
  %v280 = vmul.f32 %v269, %v278
  %282 = vrot.lane.b32.xlu0 %v280, 32
  %v283 = vpop.permute.xlu0 %282
  %v285 = vadd.f32 %v275, %v283
  %v286 = vtanh.pop %v285
  %288 = vrot.lane.b32.xlu0 %v286, 32
  %v289 = vpop.permute.xlu0 %288
  %v291 = vmul.f32 %v269, %v289
  %s292 = scalar_lea.vmem [#allocation4], 8
  %v293 = vld [vmem:[%s292] sm:$0xff]
  %295 = vrot.lane.b32.xlu0 %v291, 64
  %v296 = vpop.permute.xlu0 %295
  %v297 = vsel %vm49, %v296, 0
  %299 = vmatprep.subr.mxu0 0.0
  %300 = vmatpush1.msra.mxu0 0.0
  %301 = vmatprep.subr.mxu0 0.0
  %302 = vmatpush1.msra.mxu0 0.0
  %303 = vmatprep.subr.mxu0 0.0
  %304 = vmatpush1.msra.mxu0 0.0
  %305 = vmatprep.subr.mxu0 0.0
  %306 = vmatpush1.msra.mxu0 0.0
  %307 = vmatprep.subr.mxu0 0.0
  %308 = vmatpush1.msra.mxu0 0.0
  %309 = vmatprep.subr.mxu0 0.0
  %310 = vmatpush1.msra.mxu0 0.0
  %311 = vmatprep.subr.mxu0 0.0
  %312 = vmatpush1.msra.mxu0 0.0
  %313 = vmatprep.subr.mxu0 0.0
  %314 = vmatpush1.msra.mxu0 0.0
  %315 = vmatprep.subr.mxu0 0.0
  %316 = vmatpush1.msra.mxu0 0.0
  %317 = vmatprep.subr.mxu0 0.0
  %318 = vmatpush1.msra.mxu0 0.0
  %319 = vmatprep.subr.mxu0 0.0
  %320 = vmatpush1.msra.mxu0 0.0
  %321 = vmatprep.subr.mxu0 0.0
  %322 = vmatpush1.msra.mxu0 0.0
  %323 = vmatprep.subr.mxu0 0.0
  %324 = vmatpush1.msra.mxu0 %v29
  %325 = vmatprep.subr.mxu0 0.0
  %326 = vmatpush1.msra.mxu0 %v28
  %327 = vmatprep.subr.mxu0 0.0
  %328 = vmatpush1.msra.mxu0 %v27
  %329 = vmatprep.subr.mxu0 0.0
  %330 = vmatpush1.msra.mxu0 %v26
  %331 = vmatprep.subr.mxu0 0.0
  %332 = vmatpush2.msra.mxu0 0.0
  %333 = vmatprep.subr.mxu0 0.0
  %334 = vmatpush2.msra.mxu0 0.0
  %335 = vmatprep.subr.mxu0 0.0
  %336 = vmatpush2.msra.mxu0 0.0
  %337 = vmatprep.subr.mxu0 0.0
  %338 = vmatpush2.msra.mxu0 0.0
  %339 = vmatprep.subr.mxu0 0.0
  %340 = vmatpush2.msra.mxu0 0.0
  %341 = vmatprep.subr.mxu0 0.0
  %342 = vmatpush2.msra.mxu0 0.0
  %343 = vmatprep.subr.mxu0 0.0
  %344 = vmatpush2.msra.mxu0 0.0
  %345 = vmatprep.subr.mxu0 0.0
  %346 = vmatpush2.msra.mxu0 0.0
  %347 = vmatprep.subr.mxu0 0.0
  %348 = vmatpush2.msra.mxu0 0.0
  %349 = vmatprep.subr.mxu0 0.0
  %350 = vmatpush2.msra.mxu0 0.0
  %351 = vmatprep.subr.mxu0 0.0
  %352 = vmatpush2.msra.mxu0 0.0
  %353 = vmatprep.subr.mxu0 0.0
  %354 = vmatpush2.msra.mxu0 0.0
  %355 = vmatprep.subr.mxu0 0.0
  %356 = vmatpush2.msra.mxu0 0.0
  %357 = vmatprep.subr.mxu0 0.0
  %358 = vmatpush2.msra.mxu0 0.0
  %359 = vmatprep.subr.mxu0 0.0
  %360 = vmatpush2.msra.mxu0 0.0
  %361 = vmatprep.subr.mxu0 0.0
  %362 = vmatpush2.msra.mxu0 0.0
  %363 = vmatprep.mubr.f32.mxu0 0.0
  %364 = vmatmul.mubr.f32.gmra.mxu0 %v297
  %v365 = vpop.f32.mrf.mxu0
  %v366 = vadd.f32 0.0, %v365
  %v367 = vpop.f32.mrf.mxu0
  %368 = vdwg.mxu0
  %v369 = vadd.f32 %v293, %v366
  %v370 = vxor.u32 %v369, 2147483648
  %v371 = vmul.f32 %v370, 1.442695
  %v372 = vpow.pop %v371
  %v373 = vadd.f32 %v372, 1.0
  %v374 = vrcp.pop %v373
  %v375 = vmul.f32 1.0, %v374
  %v376 = vtanh.pop %v369
  %v377 = vmul.f32 %v375, %v285
  %379 = vrot.lane.b32.xlu0 %v376, 32
  %v380 = vpop.permute.xlu0 %379
  %v382 = vmul.f32 %v375, %v380
  %384 = vrot.lane.b32.xlu0 %v382, 32
  %v385 = vpop.permute.xlu0 %384
  %v387 = vadd.f32 %v377, %v385
  %v388 = vtanh.pop %v387
  %390 = vrot.lane.b32.xlu0 %v388, 32
  %v391 = vpop.permute.xlu0 %390
  %v393 = vmul.f32 %v375, %v391
  %s394 = scalar_lea.vmem [#allocation4], 16
  %v395 = vld [vmem:[%s394] sm:$0xff]
  %397 = vrot.lane.b32.xlu0 %v393, 64
  %v398 = vpop.permute.xlu0 %397
  %v399 = vsel %vm49, %v398, 0
  %401 = vmatprep.subr.mxu0 0.0
  %402 = vmatpush1.msra.mxu0 0.0
  %403 = vmatprep.subr.mxu0 0.0
  %404 = vmatpush1.msra.mxu0 0.0
  %405 = vmatprep.subr.mxu0 0.0
  %406 = vmatpush1.msra.mxu0 0.0
  %407 = vmatprep.subr.mxu0 0.0
  %408 = vmatpush1.msra.mxu0 0.0
  %409 = vmatprep.subr.mxu0 0.0
  %410 = vmatpush1.msra.mxu0 0.0
  %411 = vmatprep.subr.mxu0 0.0
  %412 = vmatpush1.msra.mxu0 0.0
  %413 = vmatprep.subr.mxu0 0.0
  %414 = vmatpush1.msra.mxu0 0.0
  %415 = vmatprep.subr.mxu0 0.0
  %416 = vmatpush1.msra.mxu0 0.0
  %417 = vmatprep.subr.mxu0 0.0
  %418 = vmatpush1.msra.mxu0 0.0
  %419 = vmatprep.subr.mxu0 0.0
  %420 = vmatpush1.msra.mxu0 0.0
  %421 = vmatprep.subr.mxu0 0.0
  %422 = vmatpush1.msra.mxu0 0.0
  %423 = vmatprep.subr.mxu0 0.0
  %424 = vmatpush1.msra.mxu0 0.0
  %425 = vmatprep.subr.mxu0 0.0
  %426 = vmatpush1.msra.mxu0 %v29
  %427 = vmatprep.subr.mxu0 0.0
  %428 = vmatpush1.msra.mxu0 %v28
  %429 = vmatprep.subr.mxu0 0.0
  %430 = vmatpush1.msra.mxu0 %v27
  %431 = vmatprep.subr.mxu0 0.0
  %432 = vmatpush1.msra.mxu0 %v26
  %433 = vmatprep.subr.mxu0 0.0
  %434 = vmatpush2.msra.mxu0 0.0
  %435 = vmatprep.subr.mxu0 0.0
  %436 = vmatpush2.msra.mxu0 0.0
  %437 = vmatprep.subr.mxu0 0.0
  %438 = vmatpush2.msra.mxu0 0.0
  %439 = vmatprep.subr.mxu0 0.0
  %440 = vmatpush2.msra.mxu0 0.0
  %441 = vmatprep.subr.mxu0 0.0
  %442 = vmatpush2.msra.mxu0 0.0
  %443 = vmatprep.subr.mxu0 0.0
  %444 = vmatpush2.msra.mxu0 0.0
  %445 = vmatprep.subr.mxu0 0.0
  %446 = vmatpush2.msra.mxu0 0.0
  %447 = vmatprep.subr.mxu0 0.0
  %448 = vmatpush2.msra.mxu0 0.0
  %449 = vmatprep.subr.mxu0 0.0
  %450 = vmatpush2.msra.mxu0 0.0
  %451 = vmatprep.subr.mxu0 0.0
  %452 = vmatpush2.msra.mxu0 0.0
  %453 = vmatprep.subr.mxu0 0.0
  %454 = vmatpush2.msra.mxu0 0.0
  %455 = vmatprep.subr.mxu0 0.0
  %456 = vmatpush2.msra.mxu0 0.0
  %457 = vmatprep.subr.mxu0 0.0
  %458 = vmatpush2.msra.mxu0 0.0
  %459 = vmatprep.subr.mxu0 0.0
  %460 = vmatpush2.msra.mxu0 0.0
  %461 = vmatprep.subr.mxu0 0.0
  %462 = vmatpush2.msra.mxu0 0.0
  %463 = vmatprep.subr.mxu0 0.0
  %464 = vmatpush2.msra.mxu0 0.0
  %465 = vmatprep.mubr.f32.mxu0 0.0
  %466 = vmatmul.mubr.f32.gmra.mxu0 %v399
  %v467 = vpop.f32.mrf.mxu0
  %v468 = vadd.f32 0.0, %v467
  %v469 = vpop.f32.mrf.mxu0
  %470 = vdwg.mxu0
  %v471 = vadd.f32 %v395, %v468
  %v472 = vxor.u32 %v471, 2147483648
  %v473 = vmul.f32 %v472, 1.442695
  %v474 = vpow.pop %v473
  %v475 = vadd.f32 %v474, 1.0
  %v476 = vrcp.pop %v475
  %v477 = vmul.f32 1.0, %v476
  %v478 = vtanh.pop %v471
  %v479 = vmul.f32 %v477, %v387
  %481 = vrot.lane.b32.xlu0 %v478, 32
  %v482 = vpop.permute.xlu0 %481
  %v484 = vmul.f32 %v477, %v482
  %486 = vrot.lane.b32.xlu0 %v484, 32
  %v487 = vpop.permute.xlu0 %486
  %v489 = vadd.f32 %v479, %v487
  %v490 = vtanh.pop %v489
  %492 = vrot.lane.b32.xlu0 %v490, 32
  %v493 = vpop.permute.xlu0 %492
  %v495 = vmul.f32 %v477, %v493
  %s496 = scalar_lea.vmem [#allocation4], 24
  %v497 = vld [vmem:[%s496] sm:$0xff]
  %499 = vrot.lane.b32.xlu0 %v495, 64
  %v500 = vpop.permute.xlu0 %499
  %v501 = vsel %vm49, %v500, 0
  %503 = vmatprep.subr.mxu0 0.0
  %504 = vmatpush1.msra.mxu0 0.0
  %505 = vmatprep.subr.mxu0 0.0
  %506 = vmatpush1.msra.mxu0 0.0
  %507 = vmatprep.subr.mxu0 0.0
  %508 = vmatpush1.msra.mxu0 0.0
  %509 = vmatprep.subr.mxu0 0.0
  %510 = vmatpush1.msra.mxu0 0.0
  %511 = vmatprep.subr.mxu0 0.0
  %512 = vmatpush1.msra.mxu0 0.0
  %513 = vmatprep.subr.mxu0 0.0
  %514 = vmatpush1.msra.mxu0 0.0
  %515 = vmatprep.subr.mxu0 0.0
  %516 = vmatpush1.msra.mxu0 0.0
  %517 = vmatprep.subr.mxu0 0.0
  %518 = vmatpush1.msra.mxu0 0.0
  %519 = vmatprep.subr.mxu0 0.0
  %520 = vmatpush1.msra.mxu0 0.0
  %521 = vmatprep.subr.mxu0 0.0
  %522 = vmatpush1.msra.mxu0 0.0
  %523 = vmatprep.subr.mxu0 0.0
  %524 = vmatpush1.msra.mxu0 0.0
  %525 = vmatprep.subr.mxu0 0.0
  %526 = vmatpush1.msra.mxu0 0.0
  %527 = vmatprep.subr.mxu0 0.0
  %528 = vmatpush1.msra.mxu0 %v29
  %529 = vmatprep.subr.mxu0 0.0
  %530 = vmatpush1.msra.mxu0 %v28
  %531 = vmatprep.subr.mxu0 0.0
  %532 = vmatpush1.msra.mxu0 %v27
  %533 = vmatprep.subr.mxu0 0.0
  %534 = vmatpush1.msra.mxu0 %v26
  %535 = vmatprep.subr.mxu0 0.0
  %536 = vmatpush2.msra.mxu0 0.0
  %537 = vmatprep.subr.mxu0 0.0
  %538 = vmatpush2.msra.mxu0 0.0
  %539 = vmatprep.subr.mxu0 0.0
  %540 = vmatpush2.msra.mxu0 0.0
  %541 = vmatprep.subr.mxu0 0.0
  %542 = vmatpush2.msra.mxu0 0.0
  %543 = vmatprep.subr.mxu0 0.0
  %544 = vmatpush2.msra.mxu0 0.0
  %545 = vmatprep.subr.mxu0 0.0
  %546 = vmatpush2.msra.mxu0 0.0
  %547 = vmatprep.subr.mxu0 0.0
  %548 = vmatpush2.msra.mxu0 0.0
  %549 = vmatprep.subr.mxu0 0.0
  %550 = vmatpush2.msra.mxu0 0.0
  %551 = vmatprep.subr.mxu0 0.0
  %552 = vmatpush2.msra.mxu0 0.0
  %553 = vmatprep.subr.mxu0 0.0
  %554 = vmatpush2.msra.mxu0 0.0
  %555 = vmatprep.subr.mxu0 0.0
  %556 = vmatpush2.msra.mxu0 0.0
  %557 = vmatprep.subr.mxu0 0.0
  %558 = vmatpush2.msra.mxu0 0.0
  %559 = vmatprep.subr.mxu0 0.0
  %560 = vmatpush2.msra.mxu0 0.0
  %561 = vmatprep.subr.mxu0 0.0
  %562 = vmatpush2.msra.mxu0 0.0
  %563 = vmatprep.subr.mxu0 0.0
  %564 = vmatpush2.msra.mxu0 0.0
  %565 = vmatprep.subr.mxu0 0.0
  %566 = vmatpush2.msra.mxu0 0.0
  %567 = vmatprep.mubr.f32.mxu0 0.0
  %568 = vmatmul.mubr.f32.gmra.mxu0 %v501
  %v569 = vpop.f32.mrf.mxu0
  %v570 = vadd.f32 0.0, %v569
  %v571 = vpop.f32.mrf.mxu0
  %572 = vdwg.mxu0
  %v573 = vadd.f32 %v497, %v570
  %v574 = vxor.u32 %v573, 2147483648
  %v575 = vmul.f32 %v574, 1.442695
  %v576 = vpow.pop %v575
  %v577 = vadd.f32 %v576, 1.0
  %v578 = vrcp.pop %v577
  %v579 = vmul.f32 1.0, %v578
  %v580 = vtanh.pop %v573
  %v581 = vmul.f32 %v579, %v489
  %583 = vrot.lane.b32.xlu0 %v580, 32
  %v584 = vpop.permute.xlu0 %583
  %v586 = vmul.f32 %v579, %v584
  %588 = vrot.lane.b32.xlu0 %v586, 32
  %v589 = vpop.permute.xlu0 %588
  %v591 = vadd.f32 %v581, %v589
  %v592 = vtanh.pop %v591
  %594 = vrot.lane.b32.xlu0 %v592, 32
  %v595 = vpop.permute.xlu0 %594
  %v597 = vmul.f32 %v579, %v595
  %s598 = scalar_lea.vmem [#allocation4], 32
  %v599 = vld [vmem:[%s598] sm:$0xff]
  %601 = vrot.lane.b32.xlu0 %v597, 64
  %v602 = vpop.permute.xlu0 %601
  %v603 = vsel %vm49, %v602, 0
  %605 = vmatprep.subr.mxu0 0.0
  %606 = vmatpush1.msra.mxu0 0.0
  %607 = vmatprep.subr.mxu0 0.0
  %608 = vmatpush1.msra.mxu0 0.0
  %609 = vmatprep.subr.mxu0 0.0
  %610 = vmatpush1.msra.mxu0 0.0
  %611 = vmatprep.subr.mxu0 0.0
  %612 = vmatpush1.msra.mxu0 0.0
  %613 = vmatprep.subr.mxu0 0.0
  %614 = vmatpush1.msra.mxu0 0.0
  %615 = vmatprep.subr.mxu0 0.0
  %616 = vmatpush1.msra.mxu0 0.0
  %617 = vmatprep.subr.mxu0 0.0
  %618 = vmatpush1.msra.mxu0 0.0
  %619 = vmatprep.subr.mxu0 0.0
  %620 = vmatpush1.msra.mxu0 0.0
  %621 = vmatprep.subr.mxu0 0.0
  %622 = vmatpush1.msra.mxu0 0.0
  %623 = vmatprep.subr.mxu0 0.0
  %624 = vmatpush1.msra.mxu0 0.0
  %625 = vmatprep.subr.mxu0 0.0
  %626 = vmatpush1.msra.mxu0 0.0
  %627 = vmatprep.subr.mxu0 0.0
  %628 = vmatpush1.msra.mxu0 0.0
  %629 = vmatprep.subr.mxu0 0.0
  %630 = vmatpush1.msra.mxu0 %v29
  %631 = vmatprep.subr.mxu0 0.0
  %632 = vmatpush1.msra.mxu0 %v28
  %633 = vmatprep.subr.mxu0 0.0
  %634 = vmatpush1.msra.mxu0 %v27
  %635 = vmatprep.subr.mxu0 0.0
  %636 = vmatpush1.msra.mxu0 %v26
  %637 = vmatprep.subr.mxu0 0.0
  %638 = vmatpush2.msra.mxu0 0.0
  %639 = vmatprep.subr.mxu0 0.0
  %640 = vmatpush2.msra.mxu0 0.0
  %641 = vmatprep.subr.mxu0 0.0
  %642 = vmatpush2.msra.mxu0 0.0
  %643 = vmatprep.subr.mxu0 0.0
  %644 = vmatpush2.msra.mxu0 0.0
  %645 = vmatprep.subr.mxu0 0.0
  %646 = vmatpush2.msra.mxu0 0.0
  %647 = vmatprep.subr.mxu0 0.0
  %648 = vmatpush2.msra.mxu0 0.0
  %649 = vmatprep.subr.mxu0 0.0
  %650 = vmatpush2.msra.mxu0 0.0
  %651 = vmatprep.subr.mxu0 0.0
  %652 = vmatpush2.msra.mxu0 0.0
  %653 = vmatprep.subr.mxu0 0.0
  %654 = vmatpush2.msra.mxu0 0.0
  %655 = vmatprep.subr.mxu0 0.0
  %656 = vmatpush2.msra.mxu0 0.0
  %657 = vmatprep.subr.mxu0 0.0
  %658 = vmatpush2.msra.mxu0 0.0
  %659 = vmatprep.subr.mxu0 0.0
  %660 = vmatpush2.msra.mxu0 0.0
  %661 = vmatprep.subr.mxu0 0.0
  %662 = vmatpush2.msra.mxu0 0.0
  %663 = vmatprep.subr.mxu0 0.0
  %664 = vmatpush2.msra.mxu0 0.0
  %665 = vmatprep.subr.mxu0 0.0
  %666 = vmatpush2.msra.mxu0 0.0
  %667 = vmatprep.subr.mxu0 0.0
  %668 = vmatpush2.msra.mxu0 0.0
  %669 = vmatprep.mubr.f32.mxu0 0.0
  %670 = vmatmul.mubr.f32.gmra.mxu0 %v603
  %v671 = vpop.f32.mrf.mxu0
  %v672 = vadd.f32 0.0, %v671
  %v673 = vpop.f32.mrf.mxu0
  %674 = vdwg.mxu0
  %v675 = vadd.f32 %v599, %v672
  %v676 = vxor.u32 %v675, 2147483648
  %v677 = vmul.f32 %v676, 1.442695
  %v678 = vpow.pop %v677
  %v679 = vadd.f32 %v678, 1.0
  %v680 = vrcp.pop %v679
  %v681 = vmul.f32 1.0, %v680
  %v682 = vtanh.pop %v675
  %v683 = vmul.f32 %v681, %v591
  %685 = vrot.lane.b32.xlu0 %v682, 32
  %v686 = vpop.permute.xlu0 %685
  %v688 = vmul.f32 %v681, %v686
  %690 = vrot.lane.b32.xlu0 %v688, 32
  %v691 = vpop.permute.xlu0 %690
  %v693 = vadd.f32 %v683, %v691
  %v694 = vtanh.pop %v693
  %696 = vrot.lane.b32.xlu0 %v694, 32
  %v697 = vpop.permute.xlu0 %696
  %v699 = vmul.f32 %v681, %v697
  %s700 = scalar_lea.vmem [#allocation4], 40
  %v701 = vld [vmem:[%s700] sm:$0xff]
  %703 = vrot.lane.b32.xlu0 %v699, 64
  %v704 = vpop.permute.xlu0 %703
  %v705 = vsel %vm49, %v704, 0
  %707 = vmatprep.subr.mxu0 0.0
  %708 = vmatpush1.msra.mxu0 0.0
  %709 = vmatprep.subr.mxu0 0.0
  %710 = vmatpush1.msra.mxu0 0.0
  %711 = vmatprep.subr.mxu0 0.0
  %712 = vmatpush1.msra.mxu0 0.0
  %713 = vmatprep.subr.mxu0 0.0
  %714 = vmatpush1.msra.mxu0 0.0
  %715 = vmatprep.subr.mxu0 0.0
  %716 = vmatpush1.msra.mxu0 0.0
  %717 = vmatprep.subr.mxu0 0.0
  %718 = vmatpush1.msra.mxu0 0.0
  %719 = vmatprep.subr.mxu0 0.0
  %720 = vmatpush1.msra.mxu0 0.0
  %721 = vmatprep.subr.mxu0 0.0
  %722 = vmatpush1.msra.mxu0 0.0
  %723 = vmatprep.subr.mxu0 0.0
  %724 = vmatpush1.msra.mxu0 0.0
  %725 = vmatprep.subr.mxu0 0.0
  %726 = vmatpush1.msra.mxu0 0.0
  %727 = vmatprep.subr.mxu0 0.0
  %728 = vmatpush1.msra.mxu0 0.0
  %729 = vmatprep.subr.mxu0 0.0
  %730 = vmatpush1.msra.mxu0 0.0
  %731 = vmatprep.subr.mxu0 0.0
  %732 = vmatpush1.msra.mxu0 %v29
  %733 = vmatprep.subr.mxu0 0.0
  %734 = vmatpush1.msra.mxu0 %v28
  %735 = vmatprep.subr.mxu0 0.0
  %736 = vmatpush1.msra.mxu0 %v27
  %737 = vmatprep.subr.mxu0 0.0
  %738 = vmatpush1.msra.mxu0 %v26
  %739 = vmatprep.subr.mxu0 0.0
  %740 = vmatpush2.msra.mxu0 0.0
  %741 = vmatprep.subr.mxu0 0.0
  %742 = vmatpush2.msra.mxu0 0.0
  %743 = vmatprep.subr.mxu0 0.0
  %744 = vmatpush2.msra.mxu0 0.0
  %745 = vmatprep.subr.mxu0 0.0
  %746 = vmatpush2.msra.mxu0 0.0
  %747 = vmatprep.subr.mxu0 0.0
  %748 = vmatpush2.msra.mxu0 0.0
  %749 = vmatprep.subr.mxu0 0.0
  %750 = vmatpush2.msra.mxu0 0.0
  %751 = vmatprep.subr.mxu0 0.0
  %752 = vmatpush2.msra.mxu0 0.0
  %753 = vmatprep.subr.mxu0 0.0
  %754 = vmatpush2.msra.mxu0 0.0
  %755 = vmatprep.subr.mxu0 0.0
  %756 = vmatpush2.msra.mxu0 0.0
  %757 = vmatprep.subr.mxu0 0.0
  %758 = vmatpush2.msra.mxu0 0.0
  %759 = vmatprep.subr.mxu0 0.0
  %760 = vmatpush2.msra.mxu0 0.0
  %761 = vmatprep.subr.mxu0 0.0
  %762 = vmatpush2.msra.mxu0 0.0
  %763 = vmatprep.subr.mxu0 0.0
  %764 = vmatpush2.msra.mxu0 0.0
  %765 = vmatprep.subr.mxu0 0.0
  %766 = vmatpush2.msra.mxu0 0.0
  %767 = vmatprep.subr.mxu0 0.0
  %768 = vmatpush2.msra.mxu0 0.0
  %769 = vmatprep.subr.mxu0 0.0
  %770 = vmatpush2.msra.mxu0 0.0
  %771 = vmatprep.mubr.f32.mxu0 0.0
  %772 = vmatmul.mubr.f32.gmra.mxu0 %v705
  %v773 = vpop.f32.mrf.mxu0
  %v774 = vadd.f32 0.0, %v773
  %v775 = vpop.f32.mrf.mxu0
  %776 = vdwg.mxu0
  %v777 = vadd.f32 %v701, %v774
  %v778 = vxor.u32 %v777, 2147483648
  %v779 = vmul.f32 %v778, 1.442695
  %v780 = vpow.pop %v779
  %v781 = vadd.f32 %v780, 1.0
  %v782 = vrcp.pop %v781
  %v783 = vmul.f32 1.0, %v782
  %v784 = vtanh.pop %v777
  %v785 = vmul.f32 %v783, %v693
  %787 = vrot.lane.b32.xlu0 %v784, 32
  %v788 = vpop.permute.xlu0 %787
  %v790 = vmul.f32 %v783, %v788
  %792 = vrot.lane.b32.xlu0 %v790, 32
  %v793 = vpop.permute.xlu0 %792
  %v795 = vadd.f32 %v785, %v793
  %v796 = vtanh.pop %v795
  %798 = vrot.lane.b32.xlu0 %v796, 32
  %v799 = vpop.permute.xlu0 %798
  %v801 = vmul.f32 %v783, %v799
  %s802 = scalar_lea.vmem [#allocation4], 48
  %v803 = vld [vmem:[%s802] sm:$0xff]
  %805 = vrot.lane.b32.xlu0 %v801, 64
  %v806 = vpop.permute.xlu0 %805
  %v807 = vsel %vm49, %v806, 0
  %809 = vmatprep.subr.mxu0 0.0
  %810 = vmatpush1.msra.mxu0 0.0
  %811 = vmatprep.subr.mxu0 0.0
  %812 = vmatpush1.msra.mxu0 0.0
  %813 = vmatprep.subr.mxu0 0.0
  %814 = vmatpush1.msra.mxu0 0.0
  %815 = vmatprep.subr.mxu0 0.0
  %816 = vmatpush1.msra.mxu0 0.0
  %817 = vmatprep.subr.mxu0 0.0
  %818 = vmatpush1.msra.mxu0 0.0
  %819 = vmatprep.subr.mxu0 0.0
  %820 = vmatpush1.msra.mxu0 0.0
  %821 = vmatprep.subr.mxu0 0.0
  %822 = vmatpush1.msra.mxu0 0.0
  %823 = vmatprep.subr.mxu0 0.0
  %824 = vmatpush1.msra.mxu0 0.0
  %825 = vmatprep.subr.mxu0 0.0
  %826 = vmatpush1.msra.mxu0 0.0
  %827 = vmatprep.subr.mxu0 0.0
  %828 = vmatpush1.msra.mxu0 0.0
  %829 = vmatprep.subr.mxu0 0.0
  %830 = vmatpush1.msra.mxu0 0.0
  %831 = vmatprep.subr.mxu0 0.0
  %832 = vmatpush1.msra.mxu0 0.0
  %833 = vmatprep.subr.mxu0 0.0
  %834 = vmatpush1.msra.mxu0 %v29
  %835 = vmatprep.subr.mxu0 0.0
  %836 = vmatpush1.msra.mxu0 %v28
  %837 = vmatprep.subr.mxu0 0.0
  %838 = vmatpush1.msra.mxu0 %v27
  %839 = vmatprep.subr.mxu0 0.0
  %840 = vmatpush1.msra.mxu0 %v26
  %841 = vmatprep.subr.mxu0 0.0
  %842 = vmatpush2.msra.mxu0 0.0
  %843 = vmatprep.subr.mxu0 0.0
  %844 = vmatpush2.msra.mxu0 0.0
  %845 = vmatprep.subr.mxu0 0.0
  %846 = vmatpush2.msra.mxu0 0.0
  %847 = vmatprep.subr.mxu0 0.0
  %848 = vmatpush2.msra.mxu0 0.0
  %849 = vmatprep.subr.mxu0 0.0
  %850 = vmatpush2.msra.mxu0 0.0
  %851 = vmatprep.subr.mxu0 0.0
  %852 = vmatpush2.msra.mxu0 0.0
  %853 = vmatprep.subr.mxu0 0.0
  %854 = vmatpush2.msra.mxu0 0.0
  %855 = vmatprep.subr.mxu0 0.0
  %856 = vmatpush2.msra.mxu0 0.0
  %857 = vmatprep.subr.mxu0 0.0
  %858 = vmatpush2.msra.mxu0 0.0
  %859 = vmatprep.subr.mxu0 0.0
  %860 = vmatpush2.msra.mxu0 0.0
  %861 = vmatprep.subr.mxu0 0.0
  %862 = vmatpush2.msra.mxu0 0.0
  %863 = vmatprep.subr.mxu0 0.0
  %864 = vmatpush2.msra.mxu0 0.0
  %865 = vmatprep.subr.mxu0 0.0
  %866 = vmatpush2.msra.mxu0 0.0
  %867 = vmatprep.subr.mxu0 0.0
  %868 = vmatpush2.msra.mxu0 0.0
  %869 = vmatprep.subr.mxu0 0.0
  %870 = vmatpush2.msra.mxu0 0.0
  %871 = vmatprep.subr.mxu0 0.0
  %872 = vmatpush2.msra.mxu0 0.0
  %873 = vmatprep.mubr.f32.mxu0 0.0
  %874 = vmatmul.mubr.f32.gmra.mxu0 %v807
  %v875 = vpop.f32.mrf.mxu0
  %v876 = vadd.f32 0.0, %v875
  %v877 = vpop.f32.mrf.mxu0
  %878 = vdwg.mxu0
  %v879 = vadd.f32 %v803, %v876
  %v880 = vxor.u32 %v879, 2147483648
  %v881 = vmul.f32 %v880, 1.442695
  %v882 = vpow.pop %v881
  %v883 = vadd.f32 %v882, 1.0
  %v884 = vrcp.pop %v883
  %v885 = vmul.f32 1.0, %v884
  %v886 = vtanh.pop %v879
  %v887 = vmul.f32 %v885, %v795
  %889 = vrot.lane.b32.xlu0 %v886, 32
  %v890 = vpop.permute.xlu0 %889
  %v892 = vmul.f32 %v885, %v890
  %894 = vrot.lane.b32.xlu0 %v892, 32
  %v895 = vpop.permute.xlu0 %894
  %v897 = vadd.f32 %v887, %v895
  %v898 = vtanh.pop %v897
  %900 = vrot.lane.b32.xlu0 %v898, 32
  %v901 = vpop.permute.xlu0 %900
  %v903 = vmul.f32 %v885, %v901
  %s904 = scalar_lea.vmem [#allocation4], 56
  %v905 = vld [vmem:[%s904] sm:$0xff]
  %907 = vrot.lane.b32.xlu0 %v903, 64
  %v908 = vpop.permute.xlu0 %907
  %v909 = vsel %vm49, %v908, 0
  %911 = vmatprep.subr.mxu0 0.0
  %912 = vmatpush1.msra.mxu0 0.0
  %913 = vmatprep.subr.mxu0 0.0
  %914 = vmatpush1.msra.mxu0 0.0
  %915 = vmatprep.subr.mxu0 0.0
  %916 = vmatpush1.msra.mxu0 0.0
  %917 = vmatprep.subr.mxu0 0.0
  %918 = vmatpush1.msra.mxu0 0.0
  %919 = vmatprep.subr.mxu0 0.0
  %920 = vmatpush1.msra.mxu0 0.0
  %921 = vmatprep.subr.mxu0 0.0
  %922 = vmatpush1.msra.mxu0 0.0
  %923 = vmatprep.subr.mxu0 0.0
  %924 = vmatpush1.msra.mxu0 0.0
  %925 = vmatprep.subr.mxu0 0.0
  %926 = vmatpush1.msra.mxu0 0.0
  %927 = vmatprep.subr.mxu0 0.0
  %928 = vmatpush1.msra.mxu0 0.0
  %929 = vmatprep.subr.mxu0 0.0
  %930 = vmatpush1.msra.mxu0 0.0
  %931 = vmatprep.subr.mxu0 0.0
  %932 = vmatpush1.msra.mxu0 0.0
  %933 = vmatprep.subr.mxu0 0.0
  %934 = vmatpush1.msra.mxu0 0.0
  %935 = vmatprep.subr.mxu0 0.0
  %936 = vmatpush1.msra.mxu0 %v29
  %937 = vmatprep.subr.mxu0 0.0
  %938 = vmatpush1.msra.mxu0 %v28
  %939 = vmatprep.subr.mxu0 0.0
  %940 = vmatpush1.msra.mxu0 %v27
  %941 = vmatprep.subr.mxu0 0.0
  %942 = vmatpush1.msra.mxu0 %v26
  %943 = vmatprep.subr.mxu0 0.0
  %944 = vmatpush2.msra.mxu0 0.0
  %945 = vmatprep.subr.mxu0 0.0
  %946 = vmatpush2.msra.mxu0 0.0
  %947 = vmatprep.subr.mxu0 0.0
  %948 = vmatpush2.msra.mxu0 0.0
  %949 = vmatprep.subr.mxu0 0.0
  %950 = vmatpush2.msra.mxu0 0.0
  %951 = vmatprep.subr.mxu0 0.0
  %952 = vmatpush2.msra.mxu0 0.0
  %953 = vmatprep.subr.mxu0 0.0
  %954 = vmatpush2.msra.mxu0 0.0
  %955 = vmatprep.subr.mxu0 0.0
  %956 = vmatpush2.msra.mxu0 0.0
  %957 = vmatprep.subr.mxu0 0.0
  %958 = vmatpush2.msra.mxu0 0.0
  %959 = vmatprep.subr.mxu0 0.0
  %960 = vmatpush2.msra.mxu0 0.0
  %961 = vmatprep.subr.mxu0 0.0
  %962 = vmatpush2.msra.mxu0 0.0
  %963 = vmatprep.subr.mxu0 0.0
  %964 = vmatpush2.msra.mxu0 0.0
  %965 = vmatprep.subr.mxu0 0.0
  %966 = vmatpush2.msra.mxu0 0.0
  %967 = vmatprep.subr.mxu0 0.0
  %968 = vmatpush2.msra.mxu0 0.0
  %969 = vmatprep.subr.mxu0 0.0
  %970 = vmatpush2.msra.mxu0 0.0
  %971 = vmatprep.subr.mxu0 0.0
  %972 = vmatpush2.msra.mxu0 0.0
  %973 = vmatprep.subr.mxu0 0.0
  %974 = vmatpush2.msra.mxu0 0.0
  %975 = vmatprep.mubr.f32.mxu0 0.0
  %976 = vmatmul.mubr.f32.gmra.mxu0 %v909
  %v977 = vpop.f32.mrf.mxu0
  %v978 = vadd.f32 0.0, %v977
  %v979 = vpop.f32.mrf.mxu0
  %980 = vdwg.mxu0
  %v981 = vadd.f32 %v905, %v978
  %v982 = vxor.u32 %v981, 2147483648
  %v983 = vmul.f32 %v982, 1.442695
  %v984 = vpow.pop %v983
  %v985 = vadd.f32 %v984, 1.0
  %v986 = vrcp.pop %v985
  %v987 = vmul.f32 1.0, %v986
  %v988 = vtanh.pop %v981
  %v989 = vmul.f32 %v987, %v897
  %991 = vrot.lane.b32.xlu0 %v988, 32
  %v992 = vpop.permute.xlu0 %991
  %v994 = vmul.f32 %v987, %v992
  %996 = vrot.lane.b32.xlu0 %v994, 32
  %v997 = vpop.permute.xlu0 %996
  %v999 = vadd.f32 %v989, %v997
  %v1000 = vtanh.pop %v999
  %1002 = vrot.lane.b32.xlu0 %v1000, 32
  %v1003 = vpop.permute.xlu0 %1002
  %v1005 = vmul.f32 %v987, %v1003
  %1007 = vrot.lane.b32.xlu0 %v1005, 64
  %v1008 = vpop.permute.xlu0 %1007
  %1010 = vst.msk [vmem:[#allocation2] sm:$0xff] %vm49, %v1008
  %1012 = vrot.lane.b32.xlu0 %v999, 96
  %v1013 = vpop.permute.xlu0 %1012
  %1015 = vst.msk [vmem:[#allocation3] sm:$0xff] %vm49, %v1013
  // Predicated region
  $region22: #{encoder_forward.3} parent=0 // pred_check
    %p1016 = pneg %p19
  $region23: #{encoder_forward.3} parent=0 // pred_check_branch
    %1018 = sbr.rel (%p1016) target = $region25
  $region24: #{encoder_forward.3} parent=0 // pred_region
    %1019 = vst.msk [vmem:[%s4] sm:$0xff] %vm49, %v1008
    %1020 = vst.msk [vmem:[%s5] sm:$0xff] %vm49, %v1013
  $region25: #{encoder_forward.3} parent=0 // pred_fallthru
    _
  // Predicated region
  $region26: #{encoder_forward.3} parent=0 // pred_check
    _
  $region27: #{encoder_forward.3} parent=0 // pred_check_branch
    %1022 = sbr.rel (0) target = $region29
  $region28: #{encoder_forward.3} parent=0 // pred_region
    _
  $region29: #{encoder_forward.3} parent=0 // pred_fallthru
    _
  // Predicated region
  $region30: #{encoder_forward.3} parent=0 // pred_check
    _
  $region31: #{encoder_forward.3} parent=0 // pred_check_branch
    %1024 = sbr.rel (0) target = $region33
  $region32: #{encoder_forward.3} parent=0 // pred_region
    _
  $region33: #{encoder_forward.3} parent=0 // pred_fallthru
    _
  // Predicated region
  $region34: #{encoder_forward.3} parent=0 // pred_check
    _
  $region35: #{encoder_forward.3} parent=0 // pred_check_branch
    %1026 = sbr.rel (0) target = $region37
  $region36: #{encoder_forward.3} parent=0 // pred_region
    _
  $region37: #{encoder_forward.3} parent=0 // pred_fallthru
    _
  // Predicated region
  $region38: #{encoder_forward.3} parent=0 // pred_check
    _
  $region39: #{encoder_forward.3} parent=0 // pred_check_branch
    %1028 = sbr.rel (0) target = $region41
  $region40: #{encoder_forward.3} parent=0 // pred_region
    _
  $region41: #{encoder_forward.3} parent=0 // pred_fallthru
    _

</llo_original>
